<compile_context>
chip_gen: v5e
topology: v5e:2x2
jax: 0.10.0
libtpu: 0.0.40
codegen_flags: <defaults>
</compile_context>

<pallas_src>
import functools

import jax
import jax.numpy as jnp
import numpy as np
from jax.experimental import pallas as pl
from jax.experimental.pallas import tpu as pltpu

LANE = 128      # lane width (last dim tile)
SUBLANE = 8     # f32 sublane tile (second-to-last dim)
MASK_VAL = -1e9  # baked into padded bout lanes; safe in f32 and bf16


def _round_up(x, m):
    return ((x + m - 1) // m) * m


# ---------------------------------------------------------------------------
# Fused decoder-step kernel, grid = (num_vocab_tiles,).
#   tile 0 : embedding row-gather DMA (overlapped with h0 @ Whh0) -> ReLU
#            -> num_layers GRU cells (PyTorch gate order r, z, n)
#            -> stash final hidden in VMEM scratch, init online-LSE state
#   every tile j : logits_j = x @ Wout[:, j] + bout[:, j]  (raw, mask baked in)
#                  online max/sum-exp update, stash raw logits (VMEM resident)
#   last tile : pred = raw_logits - (m + log(s))   (log-softmax, lane dense)
# ---------------------------------------------------------------------------
def _decoder_kernel(num_layers,
                    tok_ref,      # SMEM (Bp,) int32
                    hid_ref,      # VMEM (L, Bp, D) f32
                    emb_hbm,      # ANY/HBM (V, D) f32
                    wih_ref,      # VMEM (L, D, 3D) param dtype
                    whh_ref,      # VMEM (L, D, 3D) param dtype
                    bih_ref,      # VMEM (L, 1, 3D) param dtype
                    bhh_ref,      # VMEM (L, 1, 3D) param dtype
                    wout_ref,     # VMEM tile (D, TN) param dtype
                    bout_ref,     # VMEM tile (1, TN) param dtype (mask baked in)
                    pred_ref,     # out VMEM (n_tiles, Bp, TN) f32 (resident)
                    newhid_ref,   # out VMEM (L, Bp, D) f32 (aliases hid input)
                    emb_vmem,     # scratch VMEM (Bp, D) f32
                    x_vmem,       # scratch VMEM (Bp, D) f32 (final GRU output)
                    m_vmem,       # scratch VMEM (Bp, 1) f32 (running max)
                    s_vmem,       # scratch VMEM (Bp, 1) f32 (running sum exp)
                    dma_sem):     # scratch DMA sem (1,)
    j = pl.program_id(0)
    last = pl.num_programs(0) - 1
    Bp = hid_ref.shape[1]
    D = hid_ref.shape[2]
    wdt = wih_ref.dtype   # matmul input dtype (f32 or bf16)

    # ---- Recurrent part: only at the first vocab tile ----------------------
    @pl.when(j == 0)
    def _recurrent():
        # 1) Issue per-row embedding gathers (table stays in HBM) on ONE sem.
        for i in range(Bp):
            pltpu.make_async_copy(emb_hbm.at[pl.ds(tok_ref[i], 1), :],
                                  emb_vmem.at[pl.ds(i, 1), :],
                                  dma_sem.at[0]).start()

        # 2) Overlap: layer-0 recurrent matmul does not depend on the embedding.
        gh = jnp.dot(hid_ref[0].astype(wdt), whh_ref[0],
                     preferred_element_type=jnp.float32) \
            + bhh_ref[0].astype(jnp.float32)

        # 3) Wait for all gathers (all waits before any read -> safe on 1 sem).
        for i in range(Bp):
            pltpu.make_async_copy(emb_hbm.at[pl.ds(tok_ref[i], 1), :],
                                  emb_vmem.at[pl.ds(i, 1), :],
                                  dma_sem.at[0]).wait()

        x = jnp.maximum(emb_vmem[...], 0.0)                       # ReLU (Bp, D)

        # GRU stack (seq_len == 1). Static loop: fine for small L.
        # TODO(synk): switch to lax.fori_loop with dynamic wih_ref[l] for L>=8.
        for l in range(num_layers):
            h = hid_ref[l]                                        # (Bp, D) f32
            gi = jnp.dot(x.astype(wdt), wih_ref[l],
                         preferred_element_type=jnp.float32) \
                + bih_ref[l].astype(jnp.float32)                  # (Bp, 3D)
            if l > 0:
                gh = jnp.dot(h.astype(wdt), whh_ref[l],
                             preferred_element_type=jnp.float32) \
                    + bhh_ref[l].astype(jnp.float32)

            # Lane-aligned gate blocks (each gate owns a full D-lane block).
            i_r, i_z, i_n = gi[:, 0:D], gi[:, D:2 * D], gi[:, 2 * D:3 * D]
            h_r, h_z, h_n = gh[:, 0:D], gh[:, D:2 * D], gh[:, 2 * D:3 * D]

            r = jax.nn.sigmoid(i_r + h_r)
            z = jax.nn.sigmoid(i_z + h_z)
            n = jnp.tanh(i_n + r * h_n)
            h_new = (1.0 - z) * n + z * h                         # f32

            newhid_ref[l, :, :] = h_new
            x = h_new

        x_vmem[...] = x                                           # carried over tiles
        m_vmem[...] = jnp.full_like(m_vmem, -1e30)                # online-LSE init
        s_vmem[...] = jnp.zeros_like(s_vmem)

    # ---- Vocab tile j: projection + online log-sum-exp ---------------------
    logits = jnp.dot(x_vmem[...].astype(wdt), wout_ref[...],
                     preferred_element_type=jnp.float32) \
        + bout_ref[...].astype(jnp.float32)                       # (Bp, TN)
    m_prev = m_vmem[...]                                          # (Bp, 1)
    m_new = jnp.maximum(m_prev, jnp.max(logits, axis=1, keepdims=True))
    s_vmem[...] = (s_vmem[...] * jnp.exp(m_prev - m_new)
                   + jnp.sum(jnp.exp(logits - m_new), axis=1, keepdims=True))
    m_vmem[...] = m_new
    pred_ref[j] = logits          # stash raw (masked) logits; block is resident

    # ---- Last tile: normalize everything in place ---------------------------
    @pl.when(j == last)
    def _finalize():
        lse = m_vmem[...] + jnp.log(s_vmem[...])                  # (Bp, 1)
        pred_ref[...] = pred_ref[...] - lse[None, :, :]


# ---------------------------------------------------------------------------
# Wrapper: call the fused kernel on pre-padded params / hidden state.
# ---------------------------------------------------------------------------
def _vocab_tile(vp):
    for tn in (512, 256, 128):
        if vp % tn == 0:
            return tn
    return 128


@functools.partial(jax.jit, static_argnames=("num_layers", "output_dim"))
def decoder_forward(padded, tokens, hidden_padded, *, num_layers, output_dim):
    """One decode step.

    tokens        : (B,) int   (matches input.view(1, -1) with seq_len == 1)
    hidden_padded : (L, Bp, D) f32 -- keep this buffer across steps (pad once).
    Returns (prediction (B, output_dim) f32, new hidden_padded (L, Bp, D) f32).
    """
    tokens = tokens.reshape(1, -1)[0]
    B = tokens.shape[0]
    L, Bp, D = hidden_padded.shape
    Vp = padded["wout"].shape[1]
    TN = _vocab_tile(Vp)
    n_tiles = Vp // TN
    wbytes = padded["wout"].dtype.itemsize

    # Clamp tokens so the per-row HBM DMA can never read out of bounds.
    tok_p = jnp.zeros((Bp,), jnp.int32).at[:B].set(
        jnp.clip(tokens.astype(jnp.int32), 0, output_dim - 1))

    # Scoped-VMEM budget: resident GRU weights + hidden (in/out) + resident
    # pred + double-buffered wout/bout tiles + scratch, with headroom.
    def _nb(a):
        return int(np.prod(a.shape)) * a.dtype.itemsize
    resident = (_nb(padded["wih"]) + _nb(padded["whh"])
                + _nb(padded["bih"]) + _nb(padded["bhh"])
                + 2 * L * Bp * D * 4            # hidden in + new hidden out
                + n_tiles * Bp * TN * 4         # resident raw-logits output
                + 2 * (D * TN + TN) * wbytes    # double-buffered wout/bout tiles
                + 2 * Bp * D * 4 + 8 * Bp * 4)  # scratches
    vmem_limit = int(min(max(resident + (8 << 20), 32 << 20), 64 << 20))

    kernel = functools.partial(_decoder_kernel, num_layers)
    grid_spec = pltpu.PrefetchScalarGridSpec(
        num_scalar_prefetch=0,
        grid=(n_tiles,),
        in_specs=[
            pl.BlockSpec(memory_space=pltpu.MemorySpace.SMEM),   # tokens
            pl.BlockSpec(memory_space=pltpu.MemorySpace.VMEM),   # hidden (L,Bp,D)
            pl.BlockSpec(memory_space=pl.ANY),                   # embedding (HBM)
            pl.BlockSpec(memory_space=pltpu.MemorySpace.VMEM),   # wih (L,D,3D)
            pl.BlockSpec(memory_space=pltpu.MemorySpace.VMEM),   # whh (L,D,3D)
            pl.BlockSpec(memory_space=pltpu.MemorySpace.VMEM),   # bih (L,1,3D)
            pl.BlockSpec(memory_space=pltpu.MemorySpace.VMEM),   # bhh (L,1,3D)
            pl.BlockSpec((D, TN), lambda j: (0, j)),             # wout tile
            pl.BlockSpec((1, TN), lambda j: (0, j)),             # bout tile
        ],
        out_specs=(
            pl.BlockSpec(memory_space=pltpu.MemorySpace.VMEM),   # raw logits
            pl.BlockSpec(memory_space=pltpu.MemorySpace.VMEM),   # new hidden
        ),
        scratch_shapes=[
            pltpu.VMEM((Bp, D), jnp.float32),    # gathered embedding
            pltpu.VMEM((Bp, D), jnp.float32),    # final GRU output (carried)
            pltpu.VMEM((Bp, 1), jnp.float32),    # online-LSE running max
            pltpu.VMEM((Bp, 1), jnp.float32),    # online-LSE running sum-exp
            pltpu.SemaphoreType.DMA((1,)),       # shared gather semaphore
        ],
    )
    call = pl.pallas_call(
        kernel,
        out_shape=(jax.ShapeDtypeStruct((n_tiles, Bp, TN), jnp.float32),
                   jax.ShapeDtypeStruct((L, Bp, D), jnp.float32)),
        grid_spec=grid_spec,
        compiler_params=pltpu.CompilerParams(
            dimension_semantics=("arbitrary",),   # vocab axis carries LSE state
            vmem_limit_bytes=vmem_limit),
        input_output_aliases={1: 1},              # hidden updated in place
    )
    pred_tiles, newhid_p = call(tok_p, hidden_padded, padded["emb"],
                                padded["wih"], padded["whh"],
                                padded["bih"], padded["bhh"],
                                padded["wout"], padded["bout"])

    pred_full = jnp.transpose(pred_tiles, (1, 0, 2)).reshape(Bp, Vp)
    return pred_full[:B, :output_dim], newhid_p


def pad_hidden(hidden, hidden_dim, embbed_dim):
    """Pad (L, B, H) f32 hidden to the kernel's (L, Bp, D) layout (do once)."""
    L, B, H = hidden.shape
    D = _round_up(max(hidden_dim, embbed_dim), LANE)
    Bp = _round_up(max(B, SUBLANE), SUBLANE)
    return jnp.zeros((L, Bp, D), jnp.float32).at[:, :B, :H].set(
        hidden.astype(jnp.float32))


def unpad_hidden(hidden_padded, B, H):
    return hidden_padded[:, :B, :H]


# ---------------------------------------------------------------------------
# Parameter init (PyTorch-style layout) and one-time padding/stacking.
# ---------------------------------------------------------------------------
def init_params(key, output_dim, hidden_dim, embbed_dim, num_layers):
    params = {}
    keys = jax.random.split(key, 4 + 4 * num_layers)
    k = iter(keys)
    params["embedding"] = jax.random.normal(next(k), (output_dim, embbed_dim),
                                            jnp.float32)
    bound = 1.0 / np.sqrt(hidden_dim)
    for layer in range(num_layers):
        in_dim = embbed_dim if layer == 0 else hidden_dim
        params[f"wih_t_{layer}"] = jax.random.uniform(
            next(k), (in_dim, 3 * hidden_dim), jnp.float32, -bound, bound)
        params[f"whh_t_{layer}"] = jax.random.uniform(
            next(k), (hidden_dim, 3 * hidden_dim), jnp.float32, -bound, bound)
        params[f"bih_{layer}"] = jax.random.uniform(
            next(k), (1, 3 * hidden_dim), jnp.float32, -bound, bound)
        params[f"bhh_{layer}"] = jax.random.uniform(
            next(k), (1, 3 * hidden_dim), jnp.float32, -bound, bound)
    out_bound = 1.0 / np.sqrt(hidden_dim)
    params["w_out_t"] = jax.random.uniform(
        next(k), (hidden_dim, output_dim), jnp.float32, -out_bound, out_bound)
    params["b_out"] = jax.random.uniform(
        next(k), (1, output_dim), jnp.float32, -out_bound, out_bound)
    return params


def pad_params(params, output_dim, hidden_dim, embbed_dim, num_layers,
               param_dtype=jnp.float32):
    """Pad + stack parameters once.

    Invariant the kernel relies on: every padded weight/bias entry is ZERO
    (so padded hidden lanes stay exactly 0 through the GRU recurrence), except
    padded bout lanes which carry MASK_VAL so the log-softmax ignores them.
    Embedding stays f32 (it is only DMA-gathered, never a matmul operand);
    weights/biases may be stored in bf16 (matmuls accumulate in f32).
    """
    D = _round_up(max(hidden_dim, embbed_dim), LANE)
    Vp = _round_up(output_dim, LANE)
    H, E = hidden_dim, embbed_dim

    emb = jnp.zeros((output_dim, D), jnp.float32).at[:, :E].set(
        params["embedding"])                                   # stays in HBM

    wih = jnp.zeros((num_layers, D, 3 * D), jnp.float32)
    whh = jnp.zeros((num_layers, D, 3 * D), jnp.float32)
    bih = jnp.zeros((num_layers, 1, 3 * D), jnp.float32)
    bhh = jnp.zeros((num_layers, 1, 3 * D), jnp.float32)
    for l in range(num_layers):
        in_dim = E if l == 0 else H
        w_i, w_h = params[f"wih_t_{l}"], params[f"whh_t_{l}"]
        b_i, b_h = params[f"bih_{l}"], params[f"bhh_{l}"]
        for g in range(3):                      # PyTorch gate order: r, z, n
            src = slice(g * H, (g + 1) * H)
            dst = slice(g * D, g * D + H)
            wih = wih.at[l, :in_dim, dst].set(w_i[:, src])
            whh = whh.at[l, :H, dst].set(w_h[:, src])
            bih = bih.at[l, :, dst].set(b_i[:, src])
            bhh = bhh.at[l, :, dst].set(b_h[:, src])

    wout = jnp.zeros((D, Vp), jnp.float32).at[:H, :output_dim].set(
        params["w_out_t"])
    # Vocab padding mask baked into the bias (padded wout columns are zero,
    # so padded logits == bout == MASK_VAL).
    bout = jnp.full((1, Vp), MASK_VAL, jnp.float32).at[:, :output_dim].set(
        params["b_out"])

    cast = lambda a: a.astype(param_dtype)
    return dict(emb=emb, wih=cast(wih), whh=cast(whh), bih=cast(bih),
                bhh=cast(bhh), wout=cast(wout), bout=cast(bout))


# ---------------------------------------------------------------------------
# Pure-JAX reference (unpadded) for verification.
# ---------------------------------------------------------------------------
def decoder_forward_ref(params, tokens, hidden, num_layers):
    tokens = tokens.reshape(1, -1)
    emb = jnp.maximum(params["embedding"][tokens[0]], 0.0)
    x = emb
    new_hidden = []
    for layer in range(num_layers):
        h = hidden[layer]
        hdim = h.shape[-1]
        gi = x @ params[f"wih_t_{layer}"] + params[f"bih_{layer}"]
        gh = h @ params[f"whh_t_{layer}"] + params[f"bhh_{layer}"]
        r = jax.nn.sigmoid(gi[:, :hdim] + gh[:, :hdim])
        z = jax.nn.sigmoid(gi[:, hdim:2 * hdim] + gh[:, hdim:2 * hdim])
        n = jnp.tanh(gi[:, 2 * hdim:] + r * gh[:, 2 * hdim:])
        h_new = (1.0 - z) * n + z * h
        new_hidden.append(h_new)
        x = h_new
    logits = x @ params["w_out_t"] + params["b_out"]
    pred = jax.nn.log_softmax(logits, axis=1)
    return pred, jnp.stack(new_hidden, axis=0)


if __name__ == "__main__":
    output_dim = 20     # vocab size
    hidden_dim = 32
    embbed_dim = 16
    num_layers = 2
    batch = 2

    key = jax.random.PRNGKey(0)
    kp, kt1, kt2, kh = jax.random.split(key, 4)
    params = init_params(kp, output_dim, hidden_dim, embbed_dim, num_layers)
    padded_f32 = pad_params(params, output_dim, hidden_dim, embbed_dim,
                            num_layers, param_dtype=jnp.float32)

    tokens1 = jax.random.randint(kt1, (batch,), 0, output_dim, jnp.int32)
    tokens2 = jax.random.randint(kt2, (batch,), 0, output_dim, jnp.int32)
    hidden0 = jax.random.normal(kh, (num_layers, batch, hidden_dim), jnp.float32)

    # Pad hidden ONCE; the padded buffer is carried across decode steps.
    hid_p = pad_hidden(hidden0, hidden_dim, embbed_dim)

    # -------- step 1 (f32) ---------------------------------------------------
    pred1, hid_p = decoder_forward(padded_f32, tokens1, hid_p,
                                   num_layers=num_layers, output_dim=output_dim)
    pred1 = jax.block_until_ready(pred1)
    pred1_ref, hid1_ref = decoder_forward_ref(params, tokens1, hidden0, num_layers)
    np.testing.assert_allclose(np.asarray(pred1), np.asarray(pred1_ref),
                               rtol=1e-5, atol=1e-5)
    np.testing.assert_allclose(
        np.asarray(unpad_hidden(hid_p, batch, hidden_dim)),
        np.asarray(hid1_ref), rtol=1e-5, atol=1e-5)

    # -------- step 2 (f32), reusing the padded hidden buffer ----------------
    pred2, hid_p = decoder_forward(padded_f32, tokens2, hid_p,
                                   num_layers=num_layers, output_dim=output_dim)
    pred2 = jax.block_until_ready(pred2)
    pred2_ref, hid2_ref = decoder_forward_ref(params, tokens2, hid1_ref, num_layers)
    np.testing.assert_allclose(np.asarray(pred2), np.asarray(pred2_ref),
                               rtol=1e-5, atol=1e-5)
    np.testing.assert_allclose(
        np.asarray(unpad_hidden(hid_p, batch, hidden_dim)),
        np.asarray(hid2_ref), rtol=1e-5, atol=1e-5)

    # -------- bf16-weight smoke run (opt-in path, loose tolerance) -----------
    padded_bf16 = pad_params(params, output_dim, hidden_dim, embbed_dim,
                             num_layers, param_dtype=jnp.bfloat16)
    hid_p_b = pad_hidden(hidden0, hidden_dim, embbed_dim)
    pred_b, hid_p_b = decoder_forward(padded_bf16, tokens1, hid_p_b,
                                      num_layers=num_layers,
                                      output_dim=output_dim)
    pred_b = jax.block_until_ready(pred_b)
    assert np.all(np.isfinite(np.asarray(pred_b)))
    np.testing.assert_allclose(np.asarray(pred_b), np.asarray(pred1_ref),
                               rtol=2e-1, atol=2e-1)

    print("KERNEL_OK")
</pallas_src>

<mosaic_0001>
module attributes {stable_mosaic.version = 11 : i64} {
  func.func @_decoder_kernel(%arg0: i32, %arg1: memref<8xi32, #tpu.memory_space<smem>>, %arg2: memref<2x8x128xf32, #tpu.memory_space<vmem>>, %arg3: memref<20x128xf32, #tpu.memory_space<any>>, %arg4: memref<2x128x384xf32, #tpu.memory_space<vmem>>, %arg5: memref<2x128x384xf32, #tpu.memory_space<vmem>>, %arg6: memref<2x1x384xf32, #tpu.memory_space<vmem>>, %arg7: memref<2x1x384xf32, #tpu.memory_space<vmem>>, %arg8: memref<128x128xf32, #tpu.memory_space<vmem>>, %arg9: memref<1x128xf32, #tpu.memory_space<vmem>>, %arg10: memref<1x8x128xf32, #tpu.memory_space<vmem>>, %arg11: memref<2x8x128xf32, #tpu.memory_space<vmem>>, %arg12: memref<8x128xf32, #tpu.memory_space<vmem>>, %arg13: memref<8x128xf32, #tpu.memory_space<vmem>>, %arg14: memref<8x1xf32, #tpu.memory_space<vmem>>, %arg15: memref<8x1xf32, #tpu.memory_space<vmem>>, %arg16: memref<1x!tpu.dma_semaphore, #tpu.memory_space<semaphore_mem>>) attributes {dimension_semantics = [#tpu.dimension_semantics<arbitrary>], iteration_bounds = array<i64: 1>, scalar_prefetch = 0 : i64, scratch_operands = 5 : i64, tpu.core_type = #tpu.core_type<tc>, window_params = [{transform_indices = @transform_0, window_bounds = array<i64: 8>}, {pipeline_mode = #tpu.pipeline_mode<synchronous>, transform_indices = @transform_1, window_bounds = array<i64: 2, 8, 128>}, {}, {pipeline_mode = #tpu.pipeline_mode<synchronous>, transform_indices = @transform_3, window_bounds = array<i64: 2, 128, 384>}, {pipeline_mode = #tpu.pipeline_mode<synchronous>, transform_indices = @transform_4, window_bounds = array<i64: 2, 128, 384>}, {pipeline_mode = #tpu.pipeline_mode<synchronous>, transform_indices = @transform_5, window_bounds = array<i64: 2, 1, 384>}, {pipeline_mode = #tpu.pipeline_mode<synchronous>, transform_indices = @transform_6, window_bounds = array<i64: 2, 1, 384>}, {transform_indices = @transform_7, window_bounds = array<i64: 128, 128>}, {transform_indices = @transform_8, window_bounds = array<i64: 1, 128>}, {pipeline_mode = #tpu.pipeline_mode<synchronous>, transform_indices = @transform_9, window_bounds = array<i64: 1, 8, 128>}, {pipeline_mode = #tpu.pipeline_mode<synchronous>, transform_indices = @transform_10, window_bounds = array<i64: 2, 8, 128>}]} {
    %c0_i32 = arith.constant 0 : i32
    %0 = arith.cmpi eq, %arg0, %c0_i32 : i32
    %1 = arith.extui %0 : i1 to i32
    %c0_i32_0 = arith.constant 0 : i32
    %2 = arith.cmpi ne, %1, %c0_i32_0 : i32
    scf.if %2 {
      %c0_20 = arith.constant 0 : index
      %32 = memref.load %arg1[%c0_20] : memref<8xi32, #tpu.memory_space<smem>>
      %c0_i32_21 = arith.constant 0 : i32
      %c0_i32_22 = arith.constant 0 : i32
      %33 = tpu.memref_slice %arg3[%32, %c0_i32_22] : memref<20x128xf32, #tpu.memory_space<any>> -> memref<1x128xf32, #tpu.memory_space<any>>
      %c0_i32_23 = arith.constant 0 : i32
      %c0_i32_24 = arith.constant 0 : i32
      %34 = tpu.memref_slice %arg12[%c0_i32_23, %c0_i32_24] : memref<8x128xf32, #tpu.memory_space<vmem>> -> memref<1x128xf32, #tpu.memory_space<vmem>>
      %35 = tpu.memref_slice %arg16[%c0_i32_21] : memref<1x!tpu.dma_semaphore, #tpu.memory_space<semaphore_mem>> -> memref<1x!tpu.dma_semaphore, #tpu.memory_space<semaphore_mem>>
      %36 = tpu.memref_squeeze %35 : memref<1x!tpu.dma_semaphore, #tpu.memory_space<semaphore_mem>> -> memref<!tpu.dma_semaphore, #tpu.memory_space<semaphore_mem>>
      tpu.enqueue_dma source(%33 : memref<1x128xf32, #tpu.memory_space<any>>) target(%34 : memref<1x128xf32, #tpu.memory_space<vmem>>) target_semaphore(%36 : memref<!tpu.dma_semaphore, #tpu.memory_space<semaphore_mem>>)
      %c1 = arith.constant 1 : index
      %37 = memref.load %arg1[%c1] : memref<8xi32, #tpu.memory_space<smem>>
      %c0_i32_25 = arith.constant 0 : i32
      %c0_i32_26 = arith.constant 0 : i32
      %38 = tpu.memref_slice %arg3[%37, %c0_i32_26] : memref<20x128xf32, #tpu.memory_space<any>> -> memref<1x128xf32, #tpu.memory_space<any>>
      %c1_i32 = arith.constant 1 : i32
      %c0_i32_27 = arith.constant 0 : i32
      %39 = tpu.memref_slice %arg12[%c1_i32, %c0_i32_27] : memref<8x128xf32, #tpu.memory_space<vmem>> -> memref<1x128xf32, #tpu.memory_space<vmem>>
      %40 = tpu.memref_slice %arg16[%c0_i32_25] : memref<1x!tpu.dma_semaphore, #tpu.memory_space<semaphore_mem>> -> memref<1x!tpu.dma_semaphore, #tpu.memory_space<semaphore_mem>>
      %41 = tpu.memref_squeeze %40 : memref<1x!tpu.dma_semaphore, #tpu.memory_space<semaphore_mem>> -> memref<!tpu.dma_semaphore, #tpu.memory_space<semaphore_mem>>
      tpu.enqueue_dma source(%38 : memref<1x128xf32, #tpu.memory_space<any>>) target(%39 : memref<1x128xf32, #tpu.memory_space<vmem>>) target_semaphore(%41 : memref<!tpu.dma_semaphore, #tpu.memory_space<semaphore_mem>>)
      %c2 = arith.constant 2 : index
      %42 = memref.load %arg1[%c2] : memref<8xi32, #tpu.memory_space<smem>>
      %c0_i32_28 = arith.constant 0 : i32
      %c0_i32_29 = arith.constant 0 : i32
      %43 = tpu.memref_slice %arg3[%42, %c0_i32_29] : memref<20x128xf32, #tpu.memory_space<any>> -> memref<1x128xf32, #tpu.memory_space<any>>
      %c2_i32 = arith.constant 2 : i32
      %c0_i32_30 = arith.constant 0 : i32
      %44 = tpu.memref_slice %arg12[%c2_i32, %c0_i32_30] : memref<8x128xf32, #tpu.memory_space<vmem>> -> memref<1x128xf32, #tpu.memory_space<vmem>>
      %45 = tpu.memref_slice %arg16[%c0_i32_28] : memref<1x!tpu.dma_semaphore, #tpu.memory_space<semaphore_mem>> -> memref<1x!tpu.dma_semaphore, #tpu.memory_space<semaphore_mem>>
      %46 = tpu.memref_squeeze %45 : memref<1x!tpu.dma_semaphore, #tpu.memory_space<semaphore_mem>> -> memref<!tpu.dma_semaphore, #tpu.memory_space<semaphore_mem>>
      tpu.enqueue_dma source(%43 : memref<1x128xf32, #tpu.memory_space<any>>) target(%44 : memref<1x128xf32, #tpu.memory_space<vmem>>) target_semaphore(%46 : memref<!tpu.dma_semaphore, #tpu.memory_space<semaphore_mem>>)
      %c3 = arith.constant 3 : index
      %47 = memref.load %arg1[%c3] : memref<8xi32, #tpu.memory_space<smem>>
      %c0_i32_31 = arith.constant 0 : i32
      %c0_i32_32 = arith.constant 0 : i32
      %48 = tpu.memref_slice %arg3[%47, %c0_i32_32] : memref<20x128xf32, #tpu.memory_space<any>> -> memref<1x128xf32, #tpu.memory_space<any>>
      %c3_i32 = arith.constant 3 : i32
      %c0_i32_33 = arith.constant 0 : i32
      %49 = tpu.memref_slice %arg12[%c3_i32, %c0_i32_33] : memref<8x128xf32, #tpu.memory_space<vmem>> -> memref<1x128xf32, #tpu.memory_space<vmem>>
      %50 = tpu.memref_slice %arg16[%c0_i32_31] : memref<1x!tpu.dma_semaphore, #tpu.memory_space<semaphore_mem>> -> memref<1x!tpu.dma_semaphore, #tpu.memory_space<semaphore_mem>>
      %51 = tpu.memref_squeeze %50 : memref<1x!tpu.dma_semaphore, #tpu.memory_space<semaphore_mem>> -> memref<!tpu.dma_semaphore, #tpu.memory_space<semaphore_mem>>
      tpu.enqueue_dma source(%48 : memref<1x128xf32, #tpu.memory_space<any>>) target(%49 : memref<1x128xf32, #tpu.memory_space<vmem>>) target_semaphore(%51 : memref<!tpu.dma_semaphore, #tpu.memory_space<semaphore_mem>>)
      %c4 = arith.constant 4 : index
      %52 = memref.load %arg1[%c4] : memref<8xi32, #tpu.memory_space<smem>>
      %c0_i32_34 = arith.constant 0 : i32
      %c0_i32_35 = arith.constant 0 : i32
      %53 = tpu.memref_slice %arg3[%52, %c0_i32_35] : memref<20x128xf32, #tpu.memory_space<any>> -> memref<1x128xf32, #tpu.memory_space<any>>
      %c4_i32 = arith.constant 4 : i32
      %c0_i32_36 = arith.constant 0 : i32
      %54 = tpu.memref_slice %arg12[%c4_i32, %c0_i32_36] : memref<8x128xf32, #tpu.memory_space<vmem>> -> memref<1x128xf32, #tpu.memory_space<vmem>>
      %55 = tpu.memref_slice %arg16[%c0_i32_34] : memref<1x!tpu.dma_semaphore, #tpu.memory_space<semaphore_mem>> -> memref<1x!tpu.dma_semaphore, #tpu.memory_space<semaphore_mem>>
      %56 = tpu.memref_squeeze %55 : memref<1x!tpu.dma_semaphore, #tpu.memory_space<semaphore_mem>> -> memref<!tpu.dma_semaphore, #tpu.memory_space<semaphore_mem>>
      tpu.enqueue_dma source(%53 : memref<1x128xf32, #tpu.memory_space<any>>) target(%54 : memref<1x128xf32, #tpu.memory_space<vmem>>) target_semaphore(%56 : memref<!tpu.dma_semaphore, #tpu.memory_space<semaphore_mem>>)
      %c5 = arith.constant 5 : index
      %57 = memref.load %arg1[%c5] : memref<8xi32, #tpu.memory_space<smem>>
      %c0_i32_37 = arith.constant 0 : i32
      %c0_i32_38 = arith.constant 0 : i32
      %58 = tpu.memref_slice %arg3[%57, %c0_i32_38] : memref<20x128xf32, #tpu.memory_space<any>> -> memref<1x128xf32, #tpu.memory_space<any>>
      %c5_i32 = arith.constant 5 : i32
      %c0_i32_39 = arith.constant 0 : i32
      %59 = tpu.memref_slice %arg12[%c5_i32, %c0_i32_39] : memref<8x128xf32, #tpu.memory_space<vmem>> -> memref<1x128xf32, #tpu.memory_space<vmem>>
      %60 = tpu.memref_slice %arg16[%c0_i32_37] : memref<1x!tpu.dma_semaphore, #tpu.memory_space<semaphore_mem>> -> memref<1x!tpu.dma_semaphore, #tpu.memory_space<semaphore_mem>>
      %61 = tpu.memref_squeeze %60 : memref<1x!tpu.dma_semaphore, #tpu.memory_space<semaphore_mem>> -> memref<!tpu.dma_semaphore, #tpu.memory_space<semaphore_mem>>
      tpu.enqueue_dma source(%58 : memref<1x128xf32, #tpu.memory_space<any>>) target(%59 : memref<1x128xf32, #tpu.memory_space<vmem>>) target_semaphore(%61 : memref<!tpu.dma_semaphore, #tpu.memory_space<semaphore_mem>>)
      %c6 = arith.constant 6 : index
      %62 = memref.load %arg1[%c6] : memref<8xi32, #tpu.memory_space<smem>>
      %c0_i32_40 = arith.constant 0 : i32
      %c0_i32_41 = arith.constant 0 : i32
      %63 = tpu.memref_slice %arg3[%62, %c0_i32_41] : memref<20x128xf32, #tpu.memory_space<any>> -> memref<1x128xf32, #tpu.memory_space<any>>
      %c6_i32 = arith.constant 6 : i32
      %c0_i32_42 = arith.constant 0 : i32
      %64 = tpu.memref_slice %arg12[%c6_i32, %c0_i32_42] : memref<8x128xf32, #tpu.memory_space<vmem>> -> memref<1x128xf32, #tpu.memory_space<vmem>>
      %65 = tpu.memref_slice %arg16[%c0_i32_40] : memref<1x!tpu.dma_semaphore, #tpu.memory_space<semaphore_mem>> -> memref<1x!tpu.dma_semaphore, #tpu.memory_space<semaphore_mem>>
      %66 = tpu.memref_squeeze %65 : memref<1x!tpu.dma_semaphore, #tpu.memory_space<semaphore_mem>> -> memref<!tpu.dma_semaphore, #tpu.memory_space<semaphore_mem>>
      tpu.enqueue_dma source(%63 : memref<1x128xf32, #tpu.memory_space<any>>) target(%64 : memref<1x128xf32, #tpu.memory_space<vmem>>) target_semaphore(%66 : memref<!tpu.dma_semaphore, #tpu.memory_space<semaphore_mem>>)
      %c7 = arith.constant 7 : index
      %67 = memref.load %arg1[%c7] : memref<8xi32, #tpu.memory_space<smem>>
      %c0_i32_43 = arith.constant 0 : i32
      %c0_i32_44 = arith.constant 0 : i32
      %68 = tpu.memref_slice %arg3[%67, %c0_i32_44] : memref<20x128xf32, #tpu.memory_space<any>> -> memref<1x128xf32, #tpu.memory_space<any>>
      %c7_i32 = arith.constant 7 : i32
      %c0_i32_45 = arith.constant 0 : i32
      %69 = tpu.memref_slice %arg12[%c7_i32, %c0_i32_45] : memref<8x128xf32, #tpu.memory_space<vmem>> -> memref<1x128xf32, #tpu.memory_space<vmem>>
      %70 = tpu.memref_slice %arg16[%c0_i32_43] : memref<1x!tpu.dma_semaphore, #tpu.memory_space<semaphore_mem>> -> memref<1x!tpu.dma_semaphore, #tpu.memory_space<semaphore_mem>>
      %71 = tpu.memref_squeeze %70 : memref<1x!tpu.dma_semaphore, #tpu.memory_space<semaphore_mem>> -> memref<!tpu.dma_semaphore, #tpu.memory_space<semaphore_mem>>
      tpu.enqueue_dma source(%68 : memref<1x128xf32, #tpu.memory_space<any>>) target(%69 : memref<1x128xf32, #tpu.memory_space<vmem>>) target_semaphore(%71 : memref<!tpu.dma_semaphore, #tpu.memory_space<semaphore_mem>>)
      %c0_46 = arith.constant 0 : index
      %c0_47 = arith.constant 0 : index
      %c0_48 = arith.constant 0 : index
      %72 = vector.load %arg2[%c0_46, %c0_47, %c0_48] : memref<2x8x128xf32, #tpu.memory_space<vmem>>, vector<1x8x128xf32>
      %73 = vector.shape_cast %72 : vector<1x8x128xf32> to vector<8x128xf32>
      %c0_49 = arith.constant 0 : index
      %c0_50 = arith.constant 0 : index
      %c0_51 = arith.constant 0 : index
      %74 = vector.load %arg5[%c0_49, %c0_50, %c0_51] : memref<2x128x384xf32, #tpu.memory_space<vmem>>, vector<1x128x384xf32>
      %75 = vector.shape_cast %74 : vector<1x128x384xf32> to vector<128x384xf32>
      %cst_52 = arith.constant dense<0.000000e+00> : vector<8x384xf32>
      %76 = tpu.matmul %73, %75, %cst_52 {dimension_numbers = #tpu.dot_dimension_numbers<[1], [0], [0], [1], [0, 0, 1, 1], [], []>} : vector<8x128xf32>, vector<128x384xf32>, vector<8x384xf32> -> vector<8x384xf32>
      %c0_53 = arith.constant 0 : index
      %c0_54 = arith.constant 0 : index
      %c0_55 = arith.constant 0 : index
      %77 = vector.load %arg7[%c0_53, %c0_54, %c0_55] : memref<2x1x384xf32, #tpu.memory_space<vmem>>, vector<1x1x384xf32>
      %78 = vector.shape_cast %77 : vector<1x1x384xf32> to vector<1x384xf32>
      %79 = vector.broadcast %78 : vector<1x384xf32> to vector<8x384xf32>
      %80 = arith.addf %76, %79 : vector<8x384xf32>
      %c0_56 = arith.constant 0 : index
      %81 = memref.load %arg1[%c0_56] : memref<8xi32, #tpu.memory_space<smem>>
      %c0_i32_57 = arith.constant 0 : i32
      %c0_i32_58 = arith.constant 0 : i32
      %82 = tpu.memref_slice %arg3[%81, %c0_i32_58] : memref<20x128xf32, #tpu.memory_space<any>> -> memref<1x128xf32, #tpu.memory_space<any>>
      %c0_i32_59 = arith.constant 0 : i32
      %c0_i32_60 = arith.constant 0 : i32
      %83 = tpu.memref_slice %arg12[%c0_i32_59, %c0_i32_60] : memref<8x128xf32, #tpu.memory_space<vmem>> -> memref<1x128xf32, #tpu.memory_space<vmem>>
      %84 = tpu.memref_slice %arg16[%c0_i32_57] : memref<1x!tpu.dma_semaphore, #tpu.memory_space<semaphore_mem>> -> memref<1x!tpu.dma_semaphore, #tpu.memory_space<semaphore_mem>>
      %85 = tpu.memref_squeeze %84 : memref<1x!tpu.dma_semaphore, #tpu.memory_space<semaphore_mem>> -> memref<!tpu.dma_semaphore, #tpu.memory_space<semaphore_mem>>
      tpu.wait_dma2 semaphore(%85 : memref<!tpu.dma_semaphore, #tpu.memory_space<semaphore_mem>>) src(%82 : memref<1x128xf32, #tpu.memory_space<any>>) dst(%83 : memref<1x128xf32, #tpu.memory_space<vmem>>)
      %c1_61 = arith.constant 1 : index
      %86 = memref.load %arg1[%c1_61] : memref<8xi32, #tpu.memory_space<smem>>
      %c0_i32_62 = arith.constant 0 : i32
      %c0_i32_63 = arith.constant 0 : i32
      %87 = tpu.memref_slice %arg3[%86, %c0_i32_63] : memref<20x128xf32, #tpu.memory_space<any>> -> memref<1x128xf32, #tpu.memory_space<any>>
      %c1_i32_64 = arith.constant 1 : i32
      %c0_i32_65 = arith.constant 0 : i32
      %88 = tpu.memref_slice %arg12[%c1_i32_64, %c0_i32_65] : memref<8x128xf32, #tpu.memory_space<vmem>> -> memref<1x128xf32, #tpu.memory_space<vmem>>
      %89 = tpu.memref_slice %arg16[%c0_i32_62] : memref<1x!tpu.dma_semaphore, #tpu.memory_space<semaphore_mem>> -> memref<1x!tpu.dma_semaphore, #tpu.memory_space<semaphore_mem>>
      %90 = tpu.memref_squeeze %89 : memref<1x!tpu.dma_semaphore, #tpu.memory_space<semaphore_mem>> -> memref<!tpu.dma_semaphore, #tpu.memory_space<semaphore_mem>>
      tpu.wait_dma2 semaphore(%90 : memref<!tpu.dma_semaphore, #tpu.memory_space<semaphore_mem>>) src(%87 : memref<1x128xf32, #tpu.memory_space<any>>) dst(%88 : memref<1x128xf32, #tpu.memory_space<vmem>>)
      %c2_66 = arith.constant 2 : index
      %91 = memref.load %arg1[%c2_66] : memref<8xi32, #tpu.memory_space<smem>>
      %c0_i32_67 = arith.constant 0 : i32
      %c0_i32_68 = arith.constant 0 : i32
      %92 = tpu.memref_slice %arg3[%91, %c0_i32_68] : memref<20x128xf32, #tpu.memory_space<any>> -> memref<1x128xf32, #tpu.memory_space<any>>
      %c2_i32_69 = arith.constant 2 : i32
      %c0_i32_70 = arith.constant 0 : i32
      %93 = tpu.memref_slice %arg12[%c2_i32_69, %c0_i32_70] : memref<8x128xf32, #tpu.memory_space<vmem>> -> memref<1x128xf32, #tpu.memory_space<vmem>>
      %94 = tpu.memref_slice %arg16[%c0_i32_67] : memref<1x!tpu.dma_semaphore, #tpu.memory_space<semaphore_mem>> -> memref<1x!tpu.dma_semaphore, #tpu.memory_space<semaphore_mem>>
      %95 = tpu.memref_squeeze %94 : memref<1x!tpu.dma_semaphore, #tpu.memory_space<semaphore_mem>> -> memref<!tpu.dma_semaphore, #tpu.memory_space<semaphore_mem>>
      tpu.wait_dma2 semaphore(%95 : memref<!tpu.dma_semaphore, #tpu.memory_space<semaphore_mem>>) src(%92 : memref<1x128xf32, #tpu.memory_space<any>>) dst(%93 : memref<1x128xf32, #tpu.memory_space<vmem>>)
      %c3_71 = arith.constant 3 : index
      %96 = memref.load %arg1[%c3_71] : memref<8xi32, #tpu.memory_space<smem>>
      %c0_i32_72 = arith.constant 0 : i32
      %c0_i32_73 = arith.constant 0 : i32
      %97 = tpu.memref_slice %arg3[%96, %c0_i32_73] : memref<20x128xf32, #tpu.memory_space<any>> -> memref<1x128xf32, #tpu.memory_space<any>>
      %c3_i32_74 = arith.constant 3 : i32
      %c0_i32_75 = arith.constant 0 : i32
      %98 = tpu.memref_slice %arg12[%c3_i32_74, %c0_i32_75] : memref<8x128xf32, #tpu.memory_space<vmem>> -> memref<1x128xf32, #tpu.memory_space<vmem>>
      %99 = tpu.memref_slice %arg16[%c0_i32_72] : memref<1x!tpu.dma_semaphore, #tpu.memory_space<semaphore_mem>> -> memref<1x!tpu.dma_semaphore, #tpu.memory_space<semaphore_mem>>
      %100 = tpu.memref_squeeze %99 : memref<1x!tpu.dma_semaphore, #tpu.memory_space<semaphore_mem>> -> memref<!tpu.dma_semaphore, #tpu.memory_space<semaphore_mem>>
      tpu.wait_dma2 semaphore(%100 : memref<!tpu.dma_semaphore, #tpu.memory_space<semaphore_mem>>) src(%97 : memref<1x128xf32, #tpu.memory_space<any>>) dst(%98 : memref<1x128xf32, #tpu.memory_space<vmem>>)
      %c4_76 = arith.constant 4 : index
      %101 = memref.load %arg1[%c4_76] : memref<8xi32, #tpu.memory_space<smem>>
      %c0_i32_77 = arith.constant 0 : i32
      %c0_i32_78 = arith.constant 0 : i32
      %102 = tpu.memref_slice %arg3[%101, %c0_i32_78] : memref<20x128xf32, #tpu.memory_space<any>> -> memref<1x128xf32, #tpu.memory_space<any>>
      %c4_i32_79 = arith.constant 4 : i32
      %c0_i32_80 = arith.constant 0 : i32
      %103 = tpu.memref_slice %arg12[%c4_i32_79, %c0_i32_80] : memref<8x128xf32, #tpu.memory_space<vmem>> -> memref<1x128xf32, #tpu.memory_space<vmem>>
      %104 = tpu.memref_slice %arg16[%c0_i32_77] : memref<1x!tpu.dma_semaphore, #tpu.memory_space<semaphore_mem>> -> memref<1x!tpu.dma_semaphore, #tpu.memory_space<semaphore_mem>>
      %105 = tpu.memref_squeeze %104 : memref<1x!tpu.dma_semaphore, #tpu.memory_space<semaphore_mem>> -> memref<!tpu.dma_semaphore, #tpu.memory_space<semaphore_mem>>
      tpu.wait_dma2 semaphore(%105 : memref<!tpu.dma_semaphore, #tpu.memory_space<semaphore_mem>>) src(%102 : memref<1x128xf32, #tpu.memory_space<any>>) dst(%103 : memref<1x128xf32, #tpu.memory_space<vmem>>)
      %c5_81 = arith.constant 5 : index
      %106 = memref.load %arg1[%c5_81] : memref<8xi32, #tpu.memory_space<smem>>
      %c0_i32_82 = arith.constant 0 : i32
      %c0_i32_83 = arith.constant 0 : i32
      %107 = tpu.memref_slice %arg3[%106, %c0_i32_83] : memref<20x128xf32, #tpu.memory_space<any>> -> memref<1x128xf32, #tpu.memory_space<any>>
      %c5_i32_84 = arith.constant 5 : i32
      %c0_i32_85 = arith.constant 0 : i32
      %108 = tpu.memref_slice %arg12[%c5_i32_84, %c0_i32_85] : memref<8x128xf32, #tpu.memory_space<vmem>> -> memref<1x128xf32, #tpu.memory_space<vmem>>
      %109 = tpu.memref_slice %arg16[%c0_i32_82] : memref<1x!tpu.dma_semaphore, #tpu.memory_space<semaphore_mem>> -> memref<1x!tpu.dma_semaphore, #tpu.memory_space<semaphore_mem>>
      %110 = tpu.memref_squeeze %109 : memref<1x!tpu.dma_semaphore, #tpu.memory_space<semaphore_mem>> -> memref<!tpu.dma_semaphore, #tpu.memory_space<semaphore_mem>>
      tpu.wait_dma2 semaphore(%110 : memref<!tpu.dma_semaphore, #tpu.memory_space<semaphore_mem>>) src(%107 : memref<1x128xf32, #tpu.memory_space<any>>) dst(%108 : memref<1x128xf32, #tpu.memory_space<vmem>>)
      %c6_86 = arith.constant 6 : index
      %111 = memref.load %arg1[%c6_86] : memref<8xi32, #tpu.memory_space<smem>>
      %c0_i32_87 = arith.constant 0 : i32
      %c0_i32_88 = arith.constant 0 : i32
      %112 = tpu.memref_slice %arg3[%111, %c0_i32_88] : memref<20x128xf32, #tpu.memory_space<any>> -> memref<1x128xf32, #tpu.memory_space<any>>
      %c6_i32_89 = arith.constant 6 : i32
      %c0_i32_90 = arith.constant 0 : i32
      %113 = tpu.memref_slice %arg12[%c6_i32_89, %c0_i32_90] : memref<8x128xf32, #tpu.memory_space<vmem>> -> memref<1x128xf32, #tpu.memory_space<vmem>>
      %114 = tpu.memref_slice %arg16[%c0_i32_87] : memref<1x!tpu.dma_semaphore, #tpu.memory_space<semaphore_mem>> -> memref<1x!tpu.dma_semaphore, #tpu.memory_space<semaphore_mem>>
      %115 = tpu.memref_squeeze %114 : memref<1x!tpu.dma_semaphore, #tpu.memory_space<semaphore_mem>> -> memref<!tpu.dma_semaphore, #tpu.memory_space<semaphore_mem>>
      tpu.wait_dma2 semaphore(%115 : memref<!tpu.dma_semaphore, #tpu.memory_space<semaphore_mem>>) src(%112 : memref<1x128xf32, #tpu.memory_space<any>>) dst(%113 : memref<1x128xf32, #tpu.memory_space<vmem>>)
      %c7_91 = arith.constant 7 : index
      %116 = memref.load %arg1[%c7_91] : memref<8xi32, #tpu.memory_space<smem>>
      %c0_i32_92 = arith.constant 0 : i32
      %c0_i32_93 = arith.constant 0 : i32
      %117 = tpu.memref_slice %arg3[%116, %c0_i32_93] : memref<20x128xf32, #tpu.memory_space<any>> -> memref<1x128xf32, #tpu.memory_space<any>>
      %c7_i32_94 = arith.constant 7 : i32
      %c0_i32_95 = arith.constant 0 : i32
      %118 = tpu.memref_slice %arg12[%c7_i32_94, %c0_i32_95] : memref<8x128xf32, #tpu.memory_space<vmem>> -> memref<1x128xf32, #tpu.memory_space<vmem>>
      %119 = tpu.memref_slice %arg16[%c0_i32_92] : memref<1x!tpu.dma_semaphore, #tpu.memory_space<semaphore_mem>> -> memref<1x!tpu.dma_semaphore, #tpu.memory_space<semaphore_mem>>
      %120 = tpu.memref_squeeze %119 : memref<1x!tpu.dma_semaphore, #tpu.memory_space<semaphore_mem>> -> memref<!tpu.dma_semaphore, #tpu.memory_space<semaphore_mem>>
      tpu.wait_dma2 semaphore(%120 : memref<!tpu.dma_semaphore, #tpu.memory_space<semaphore_mem>>) src(%117 : memref<1x128xf32, #tpu.memory_space<any>>) dst(%118 : memref<1x128xf32, #tpu.memory_space<vmem>>)
      %c0_96 = arith.constant 0 : index
      %c0_97 = arith.constant 0 : index
      %121 = vector.load %arg12[%c0_96, %c0_97] : memref<8x128xf32, #tpu.memory_space<vmem>>, vector<8x128xf32>
      %cst_98 = arith.constant 0.000000e+00 : f32
      %122 = vector.broadcast %cst_98 : f32 to vector<8x128xf32>
      %123 = arith.maximumf %121, %122 : vector<8x128xf32>
      %c0_99 = arith.constant 0 : index
      %c0_100 = arith.constant 0 : index
      %c0_101 = arith.constant 0 : index
      %124 = vector.load %arg2[%c0_99, %c0_100, %c0_101] : memref<2x8x128xf32, #tpu.memory_space<vmem>>, vector<1x8x128xf32>
      %125 = vector.shape_cast %124 : vector<1x8x128xf32> to vector<8x128xf32>
      %c0_102 = arith.constant 0 : index
      %c0_103 = arith.constant 0 : index
      %c0_104 = arith.constant 0 : index
      %126 = vector.load %arg4[%c0_102, %c0_103, %c0_104] : memref<2x128x384xf32, #tpu.memory_space<vmem>>, vector<1x128x384xf32>
      %127 = vector.shape_cast %126 : vector<1x128x384xf32> to vector<128x384xf32>
      %cst_105 = arith.constant dense<0.000000e+00> : vector<8x384xf32>
      %128 = tpu.matmul %123, %127, %cst_105 {dimension_numbers = #tpu.dot_dimension_numbers<[1], [0], [0], [1], [0, 0, 1, 1], [], []>} : vector<8x128xf32>, vector<128x384xf32>, vector<8x384xf32> -> vector<8x384xf32>
      %c0_106 = arith.constant 0 : index
      %c0_107 = arith.constant 0 : index
      %c0_108 = arith.constant 0 : index
      %129 = vector.load %arg6[%c0_106, %c0_107, %c0_108] : memref<2x1x384xf32, #tpu.memory_space<vmem>>, vector<1x1x384xf32>
      %130 = vector.shape_cast %129 : vector<1x1x384xf32> to vector<1x384xf32>
      %131 = vector.broadcast %130 : vector<1x384xf32> to vector<8x384xf32>
      %132 = arith.addf %128, %131 : vector<8x384xf32>
      %133 = vector.extract_strided_slice %132 {offsets = [0, 0], sizes = [8, 128], strides = [1, 1]} : vector<8x384xf32> to vector<8x128xf32>
      %134 = vector.extract_strided_slice %132 {offsets = [0, 128], sizes = [8, 128], strides = [1, 1]} : vector<8x384xf32> to vector<8x128xf32>
      %135 = vector.extract_strided_slice %132 {offsets = [0, 256], sizes = [8, 128], strides = [1, 1]} : vector<8x384xf32> to vector<8x128xf32>
      %136 = vector.extract_strided_slice %80 {offsets = [0, 0], sizes = [8, 128], strides = [1, 1]} : vector<8x384xf32> to vector<8x128xf32>
      %137 = vector.extract_strided_slice %80 {offsets = [0, 128], sizes = [8, 128], strides = [1, 1]} : vector<8x384xf32> to vector<8x128xf32>
      %138 = vector.extract_strided_slice %80 {offsets = [0, 256], sizes = [8, 128], strides = [1, 1]} : vector<8x384xf32> to vector<8x128xf32>
      %139 = arith.addf %133, %136 : vector<8x128xf32>
      %140 = arith.negf %139 : vector<8x128xf32>
      %141 = math.exp %140 : vector<8x128xf32>
      %cst_109 = arith.constant 1.000000e+00 : f32
      %142 = vector.broadcast %cst_109 : f32 to vector<8x128xf32>
      %143 = arith.addf %142, %141 : vector<8x128xf32>
      %144 = arith.divf %142, %143 : vector<8x128xf32>
      %145 = arith.addf %134, %137 : vector<8x128xf32>
      %146 = arith.negf %145 : vector<8x128xf32>
      %147 = math.exp %146 : vector<8x128xf32>
      %cst_110 = arith.constant 1.000000e+00 : f32
      %148 = vector.broadcast %cst_110 : f32 to vector<8x128xf32>
      %149 = arith.addf %148, %147 : vector<8x128xf32>
      %150 = arith.divf %148, %149 : vector<8x128xf32>
      %151 = arith.mulf %144, %138 : vector<8x128xf32>
      %152 = arith.addf %135, %151 : vector<8x128xf32>
      %153 = math.tanh %152 : vector<8x128xf32>
      %cst_111 = arith.constant 1.000000e+00 : f32
      %154 = vector.broadcast %cst_111 : f32 to vector<8x128xf32>
      %155 = arith.subf %154, %150 : vector<8x128xf32>
      %156 = arith.mulf %155, %153 : vector<8x128xf32>
      %157 = arith.mulf %150, %125 : vector<8x128xf32>
      %158 = arith.addf %156, %157 : vector<8x128xf32>
      %c0_112 = arith.constant 0 : index
      %c0_113 = arith.constant 0 : index
      %c0_114 = arith.constant 0 : index
      %159 = vector.load %arg11[%c0_112, %c0_113, %c0_114] : memref<2x8x128xf32, #tpu.memory_space<vmem>>, vector<1x8x128xf32>
      %160 = vector.shape_cast %159 : vector<1x8x128xf32> to vector<8x128xf32>
      %161 = vector.shape_cast %158 : vector<8x128xf32> to vector<1x8x128xf32>
      tpu.vector_store %arg11[%c0_112, %c0_113, %c0_114], %161 {strides = array<i32>} : memref<2x8x128xf32, #tpu.memory_space<vmem>>, vector<1x8x128xf32>,
      %c1_115 = arith.constant 1 : index
      %c0_116 = arith.constant 0 : index
      %c0_117 = arith.constant 0 : index
      %162 = vector.load %arg2[%c1_115, %c0_116, %c0_117] : memref<2x8x128xf32, #tpu.memory_space<vmem>>, vector<1x8x128xf32>
      %163 = vector.shape_cast %162 : vector<1x8x128xf32> to vector<8x128xf32>
      %c1_118 = arith.constant 1 : index
      %c0_119 = arith.constant 0 : index
      %c0_120 = arith.constant 0 : index
      %164 = vector.load %arg4[%c1_118, %c0_119, %c0_120] : memref<2x128x384xf32, #tpu.memory_space<vmem>>, vector<1x128x384xf32>
      %165 = vector.shape_cast %164 : vector<1x128x384xf32> to vector<128x384xf32>
      %cst_121 = arith.constant dense<0.000000e+00> : vector<8x384xf32>
      %166 = tpu.matmul %158, %165, %cst_121 {dimension_numbers = #tpu.dot_dimension_numbers<[1], [0], [0], [1], [0, 0, 1, 1], [], []>} : vector<8x128xf32>, vector<128x384xf32>, vector<8x384xf32> -> vector<8x384xf32>
      %c1_122 = arith.constant 1 : index
      %c0_123 = arith.constant 0 : index
      %c0_124 = arith.constant 0 : index
      %167 = vector.load %arg6[%c1_122, %c0_123, %c0_124] : memref<2x1x384xf32, #tpu.memory_space<vmem>>, vector<1x1x384xf32>
      %168 = vector.shape_cast %167 : vector<1x1x384xf32> to vector<1x384xf32>
      %169 = vector.broadcast %168 : vector<1x384xf32> to vector<8x384xf32>
      %170 = arith.addf %166, %169 : vector<8x384xf32>
      %c1_125 = arith.constant 1 : index
      %c0_126 = arith.constant 0 : index
      %c0_127 = arith.constant 0 : index
      %171 = vector.load %arg5[%c1_125, %c0_126, %c0_127] : memref<2x128x384xf32, #tpu.memory_space<vmem>>, vector<1x128x384xf32>
      %172 = vector.shape_cast %171 : vector<1x128x384xf32> to vector<128x384xf32>
      %cst_128 = arith.constant dense<0.000000e+00> : vector<8x384xf32>
      %173 = tpu.matmul %163, %172, %cst_128 {dimension_numbers = #tpu.dot_dimension_numbers<[1], [0], [0], [1], [0, 0, 1, 1], [], []>} : vector<8x128xf32>, vector<128x384xf32>, vector<8x384xf32> -> vector<8x384xf32>
      %c1_129 = arith.constant 1 : index
      %c0_130 = arith.constant 0 : index
      %c0_131 = arith.constant 0 : index
      %174 = vector.load %arg7[%c1_129, %c0_130, %c0_131] : memref<2x1x384xf32, #tpu.memory_space<vmem>>, vector<1x1x384xf32>
      %175 = vector.shape_cast %174 : vector<1x1x384xf32> to vector<1x384xf32>
      %176 = vector.broadcast %175 : vector<1x384xf32> to vector<8x384xf32>
      %177 = arith.addf %173, %176 : vector<8x384xf32>
      %178 = vector.extract_strided_slice %170 {offsets = [0, 0], sizes = [8, 128], strides = [1, 1]} : vector<8x384xf32> to vector<8x128xf32>
      %179 = vector.extract_strided_slice %170 {offsets = [0, 128], sizes = [8, 128], strides = [1, 1]} : vector<8x384xf32> to vector<8x128xf32>
      %180 = vector.extract_strided_slice %170 {offsets = [0, 256], sizes = [8, 128], strides = [1, 1]} : vector<8x384xf32> to vector<8x128xf32>
      %181 = vector.extract_strided_slice %177 {offsets = [0, 0], sizes = [8, 128], strides = [1, 1]} : vector<8x384xf32> to vector<8x128xf32>
      %182 = vector.extract_strided_slice %177 {offsets = [0, 128], sizes = [8, 128], strides = [1, 1]} : vector<8x384xf32> to vector<8x128xf32>
      %183 = vector.extract_strided_slice %177 {offsets = [0, 256], sizes = [8, 128], strides = [1, 1]} : vector<8x384xf32> to vector<8x128xf32>
      %184 = arith.addf %178, %181 : vector<8x128xf32>
      %185 = arith.negf %184 : vector<8x128xf32>
      %186 = math.exp %185 : vector<8x128xf32>
      %cst_132 = arith.constant 1.000000e+00 : f32
      %187 = vector.broadcast %cst_132 : f32 to vector<8x128xf32>
      %188 = arith.addf %187, %186 : vector<8x128xf32>
      %189 = arith.divf %187, %188 : vector<8x128xf32>
      %190 = arith.addf %179, %182 : vector<8x128xf32>
      %191 = arith.negf %190 : vector<8x128xf32>
      %192 = math.exp %191 : vector<8x128xf32>
      %cst_133 = arith.constant 1.000000e+00 : f32
      %193 = vector.broadcast %cst_133 : f32 to vector<8x128xf32>
      %194 = arith.addf %193, %192 : vector<8x128xf32>
      %195 = arith.divf %193, %194 : vector<8x128xf32>
      %196 = arith.mulf %189, %183 : vector<8x128xf32>
      %197 = arith.addf %180, %196 : vector<8x128xf32>
      %198 = math.tanh %197 : vector<8x128xf32>
      %cst_134 = arith.constant 1.000000e+00 : f32
      %199 = vector.broadcast %cst_134 : f32 to vector<8x128xf32>
      %200 = arith.subf %199, %195 : vector<8x128xf32>
      %201 = arith.mulf %200, %198 : vector<8x128xf32>
      %202 = arith.mulf %195, %163 : vector<8x128xf32>
      %203 = arith.addf %201, %202 : vector<8x128xf32>
      %c1_135 = arith.constant 1 : index
      %c0_136 = arith.constant 0 : index
      %c0_137 = arith.constant 0 : index
      %204 = vector.load %arg11[%c1_135, %c0_136, %c0_137] : memref<2x8x128xf32, #tpu.memory_space<vmem>>, vector<1x8x128xf32>
      %205 = vector.shape_cast %204 : vector<1x8x128xf32> to vector<8x128xf32>
      %206 = vector.shape_cast %203 : vector<8x128xf32> to vector<1x8x128xf32>
      tpu.vector_store %arg11[%c1_135, %c0_136, %c0_137], %206 {strides = array<i32>} : memref<2x8x128xf32, #tpu.memory_space<vmem>>, vector<1x8x128xf32>,
      %c0_138 = arith.constant 0 : index
      %c0_139 = arith.constant 0 : index
      %207 = vector.load %arg13[%c0_138, %c0_139] : memref<8x128xf32, #tpu.memory_space<vmem>>, vector<8x128xf32>
      tpu.vector_store %arg13[%c0_138, %c0_139], %203 {strides = array<i32>} : memref<8x128xf32, #tpu.memory_space<vmem>>, vector<8x128xf32>,
      %cst_140 = arith.constant -1.000000e+30 : f32
      %208 = vector.broadcast %cst_140 : f32 to vector<8x1xf32>
      %c0_141 = arith.constant 0 : index
      %c0_142 = arith.constant 0 : index
      %209 = vector.load %arg14[%c0_141, %c0_142] : memref<8x1xf32, #tpu.memory_space<vmem>>, vector<8x1xf32>
      tpu.vector_store %arg14[%c0_141, %c0_142], %208 {strides = array<i32>} : memref<8x1xf32, #tpu.memory_space<vmem>>, vector<8x1xf32>,
      %cst_143 = arith.constant 0.000000e+00 : f32
      %210 = vector.broadcast %cst_143 : f32 to vector<8x1xf32>
      %c0_144 = arith.constant 0 : index
      %c0_145 = arith.constant 0 : index
      %211 = vector.load %arg15[%c0_144, %c0_145] : memref<8x1xf32, #tpu.memory_space<vmem>>, vector<8x1xf32>
      tpu.vector_store %arg15[%c0_144, %c0_145], %210 {strides = array<i32>} : memref<8x1xf32, #tpu.memory_space<vmem>>, vector<8x1xf32>,
    } else {
    }
    %c0 = arith.constant 0 : index
    %c0_1 = arith.constant 0 : index
    %3 = vector.load %arg13[%c0, %c0_1] : memref<8x128xf32, #tpu.memory_space<vmem>>, vector<8x128xf32>
    %c0_2 = arith.constant 0 : index
    %c0_3 = arith.constant 0 : index
    %4 = vector.load %arg8[%c0_2, %c0_3] : memref<128x128xf32, #tpu.memory_space<vmem>>, vector<128x128xf32>
    %cst = arith.constant dense<0.000000e+00> : vector<8x128xf32>
    %5 = tpu.matmul %3, %4, %cst {dimension_numbers = #tpu.dot_dimension_numbers<[1], [0], [0], [1], [0, 0, 1, 1], [], []>} : vector<8x128xf32>, vector<128x128xf32>, vector<8x128xf32> -> vector<8x128xf32>
    %c0_4 = arith.constant 0 : index
    %c0_5 = arith.constant 0 : index
    %6 = vector.load %arg9[%c0_4, %c0_5] : memref<1x128xf32, #tpu.memory_space<vmem>>, vector<1x128xf32>
    %7 = vector.broadcast %6 : vector<1x128xf32> to vector<8x128xf32>
    %8 = arith.addf %5, %7 : vector<8x128xf32>
    %c0_6 = arith.constant 0 : index
    %c0_7 = arith.constant 0 : index
    %9 = vector.load %arg14[%c0_6, %c0_7] : memref<8x1xf32, #tpu.memory_space<vmem>>, vector<8x1xf32>
    %cst_8 = arith.constant dense<0xFF800000> : vector<8xf32>
    %10 = vector.multi_reduction <maximumf>, %8, %cst_8 [1] : vector<8x128xf32> to vector<8xf32>
    %11 = vector.shape_cast %10 : vector<8xf32> to vector<8x1xf32>
    %12 = arith.maximumf %9, %11 : vector<8x1xf32>
    %c0_9 = arith.constant 0 : index
    %c0_10 = arith.constant 0 : index
    %13 = vector.load %arg15[%c0_9, %c0_10] : memref<8x1xf32, #tpu.memory_space<vmem>>, vector<8x1xf32>
    %14 = arith.subf %9, %12 : vector<8x1xf32>
    %15 = math.exp %14 : vector<8x1xf32>
    %16 = arith.mulf %13, %15 : vector<8x1xf32>
    %17 = vector.broadcast %12 : vector<8x1xf32> to vector<8x128xf32>
    %18 = arith.subf %8, %17 : vector<8x128xf32>
    %19 = math.exp %18 : vector<8x128xf32>
    %cst_11 = arith.constant dense<0.000000e+00> : vector<8xf32>
    %20 = vector.multi_reduction <add>, %19, %cst_11 [1] : vector<8x128xf32> to vector<8xf32>
    %21 = vector.shape_cast %20 : vector<8xf32> to vector<8x1xf32>
    %22 = arith.addf %16, %21 : vector<8x1xf32>
    %c0_12 = arith.constant 0 : index
    %c0_13 = arith.constant 0 : index
    %23 = vector.load %arg15[%c0_12, %c0_13] : memref<8x1xf32, #tpu.memory_space<vmem>>, vector<8x1xf32>
    tpu.vector_store %arg15[%c0_12, %c0_13], %22 {strides = array<i32>} : memref<8x1xf32, #tpu.memory_space<vmem>>, vector<8x1xf32>,
    %c0_14 = arith.constant 0 : index
    %c0_15 = arith.constant 0 : index
    %24 = vector.load %arg14[%c0_14, %c0_15] : memref<8x1xf32, #tpu.memory_space<vmem>>, vector<8x1xf32>
    tpu.vector_store %arg14[%c0_14, %c0_15], %12 {strides = array<i32>} : memref<8x1xf32, #tpu.memory_space<vmem>>, vector<8x1xf32>,
    %25 = arith.index_cast %arg0 : i32 to index
    %c0_16 = arith.constant 0 : index
    %c0_17 = arith.constant 0 : index
    %26 = vector.load %arg10[%25, %c0_16, %c0_17] : memref<1x8x128xf32, #tpu.memory_space<vmem>>, vector<1x8x128xf32>
    %27 = vector.shape_cast %26 : vector<1x8x128xf32> to vector<8x128xf32>
    %28 = vector.shape_cast %8 : vector<8x128xf32> to vector<1x8x128xf32>
    tpu.vector_store %arg10[%25, %c0_16, %c0_17], %28 {strides = array<i32>} : memref<1x8x128xf32, #tpu.memory_space<vmem>>, vector<1x8x128xf32>,
    %c0_i32_18 = arith.constant 0 : i32
    %29 = arith.cmpi eq, %arg0, %c0_i32_18 : i32
    %30 = arith.extui %29 : i1 to i32
    %c0_i32_19 = arith.constant 0 : i32
    %31 = arith.cmpi ne, %30, %c0_i32_19 : i32
    scf.if %31 {
      %c0_20 = arith.constant 0 : index
      %c0_21 = arith.constant 0 : index
      %32 = vector.load %arg14[%c0_20, %c0_21] : memref<8x1xf32, #tpu.memory_space<vmem>>, vector<8x1xf32>
      %c0_22 = arith.constant 0 : index
      %c0_23 = arith.constant 0 : index
      %33 = vector.load %arg15[%c0_22, %c0_23] : memref<8x1xf32, #tpu.memory_space<vmem>>, vector<8x1xf32>
      %34 = math.log %33 : vector<8x1xf32>
      %35 = arith.addf %32, %34 : vector<8x1xf32>
      %c0_24 = arith.constant 0 : index
      %c0_25 = arith.constant 0 : index
      %c0_26 = arith.constant 0 : index
      %36 = vector.load %arg10[%c0_24, %c0_25, %c0_26] : memref<1x8x128xf32, #tpu.memory_space<vmem>>, vector<1x8x128xf32>
      %37 = vector.shape_cast %35 : vector<8x1xf32> to vector<1x8x1xf32>
      %38 = vector.broadcast %37 : vector<1x8x1xf32> to vector<1x8x128xf32>
      %39 = arith.subf %36, %38 : vector<1x8x128xf32>
      %c0_27 = arith.constant 0 : index
      %c0_28 = arith.constant 0 : index
      %c0_29 = arith.constant 0 : index
      %40 = vector.load %arg10[%c0_27, %c0_28, %c0_29] : memref<1x8x128xf32, #tpu.memory_space<vmem>>, vector<1x8x128xf32>
      tpu.vector_store %arg10[%c0_27, %c0_28, %c0_29], %39 {strides = array<i32>} : memref<1x8x128xf32, #tpu.memory_space<vmem>>, vector<1x8x128xf32>,
    } else {
    }
    return
  }
  func.func @transform_0(%arg0: i32) -> i32 {
    %c0_i32 = arith.constant 0 : i32
    %c0_i32_0 = arith.constant 0 : i32
    return %c0_i32 : i32
  }
  func.func @transform_1(%arg0: i32) -> (i32, i32, i32) {
    %c0_i32 = arith.constant 0 : i32
    %c0_i32_0 = arith.constant 0 : i32
    %c0_i32_1 = arith.constant 0 : i32
    %c0_i32_2 = arith.constant 0 : i32
    return %c0_i32, %c0_i32_0, %c0_i32_1 : i32, i32, i32
  }
  func.func @transform_3(%arg0: i32) -> (i32, i32, i32) {
    %c0_i32 = arith.constant 0 : i32
    %c0_i32_0 = arith.constant 0 : i32
    %c0_i32_1 = arith.constant 0 : i32
    %c0_i32_2 = arith.constant 0 : i32
    return %c0_i32, %c0_i32_0, %c0_i32_1 : i32, i32, i32
  }
  func.func @transform_4(%arg0: i32) -> (i32, i32, i32) {
    %c0_i32 = arith.constant 0 : i32
    %c0_i32_0 = arith.constant 0 : i32
    %c0_i32_1 = arith.constant 0 : i32
    %c0_i32_2 = arith.constant 0 : i32
    return %c0_i32, %c0_i32_0, %c0_i32_1 : i32, i32, i32
  }
  func.func @transform_5(%arg0: i32) -> (i32, i32, i32) {
    %c0_i32 = arith.constant 0 : i32
    %c0_i32_0 = arith.constant 0 : i32
    %c0_i32_1 = arith.constant 0 : i32
    %c0_i32_2 = arith.constant 0 : i32
    return %c0_i32, %c0_i32_0, %c0_i32_1 : i32, i32, i32
  }
  func.func @transform_6(%arg0: i32) -> (i32, i32, i32) {
    %c0_i32 = arith.constant 0 : i32
    %c0_i32_0 = arith.constant 0 : i32
    %c0_i32_1 = arith.constant 0 : i32
    %c0_i32_2 = arith.constant 0 : i32
    return %c0_i32, %c0_i32_0, %c0_i32_1 : i32, i32, i32
  }
  func.func @transform_7(%arg0: i32) -> (i32, i32) {
    %c0_i32 = arith.constant 0 : i32
    %c0_i32_0 = arith.constant 0 : i32
    return %c0_i32, %arg0 : i32, i32
  }
  func.func @transform_8(%arg0: i32) -> (i32, i32) {
    %c0_i32 = arith.constant 0 : i32
    %c0_i32_0 = arith.constant 0 : i32
    return %c0_i32, %arg0 : i32, i32
  }
  func.func @transform_9(%arg0: i32) -> (i32, i32, i32) {
    %c0_i32 = arith.constant 0 : i32
    %c0_i32_0 = arith.constant 0 : i32
    %c0_i32_1 = arith.constant 0 : i32
    %c0_i32_2 = arith.constant 0 : i32
    return %c0_i32, %c0_i32_0, %c0_i32_1 : i32, i32, i32
  }
  func.func @transform_10(%arg0: i32) -> (i32, i32, i32) {
    %c0_i32 = arith.constant 0 : i32
    %c0_i32_0 = arith.constant 0 : i32
    %c0_i32_1 = arith.constant 0 : i32
    %c0_i32_2 = arith.constant 0 : i32
    return %c0_i32, %c0_i32_0, %c0_i32_1 : i32, i32, i32
  }
}

</mosaic_0001>

<llo_original>
// kernel: decoder_forward.1
$region0: #{decoder_forward.1}
  #allocation0 [shape = 'u32[]', space=smem, size = 0x4, offset = 0x4, fixed_abs, tag = 'smem constant byte address 0x4 - core index']
  #allocation1 [shape = 'u32[72,128]{1,0:T(1,128)}', space=vmem, size = 0x9000, scoped, tag = 'internal scratch']
  #allocation2 [shape = 'f32[8,128]{1,0:T(8,128)}', space=vmem, size = 0x1000, scoped, tag = 'scratch operand']
  #allocation3 [shape = 'f32[8,128]{1,0:T(8,128)}', space=vmem, size = 0x1000, scoped, tag = 'scratch operand']
  #allocation4 [shape = 'f32[8,1]{1,0:T(8,128)}', space=vmem, size = 0x1000, scoped, tag = 'scratch operand']
  #allocation5 [shape = 'f32[8,1]{1,0:T(8,128)}', space=vmem, size = 0x1000, scoped, tag = 'scratch operand']
  #allocation6 [shape = 's32[1]{0}', space=sflag, size = 0x4, scoped, tag = 'scratch operand']
  #allocation14 [shape = 's32[]', space=sflag, size = 0x4, offset = 0, fixed_abs, tag = 'sflag constant byte address 0x0 - dummy sync flag']
  #allocation15 [shape = 's32[]', space=sflag, size = 0x4, offset = 0, fixed_abs, tag = 'sflag constant byte address 0x0 - dummy sync flag']
  #allocation16 [shape = 'u32[]', space=smem, size = 0x4, offset = 0x44, fixed_abs, tag = 'smem constant byte address 0x44 - assertion arg 0']
  #allocation17 [shape = 'u32[]', space=smem, size = 0x4, offset = 0x48, fixed_abs, tag = 'smem constant byte address 0x48 - assertion arg 1']
  #allocation18 [shape = 's32[]', space=sflag, size = 0x4, offset = 0, fixed_abs, tag = 'sflag constant byte address 0x0 - dummy sync flag']
  #allocation19 [shape = 's32[]', space=sflag, size = 0x4, offset = 0, fixed_abs, tag = 'sflag constant byte address 0x0 - dummy sync flag']
  #allocation20 [shape = 's32[]', space=sflag, size = 0x4, offset = 0, fixed_abs, tag = 'sflag constant byte address 0x0 - dummy sync flag']
  #allocation21 [shape = 's32[]', space=sflag, size = 0x4, offset = 0, fixed_abs, tag = 'sflag constant byte address 0x0 - dummy sync flag']
  #allocation22 [shape = 's32[]', space=sflag, size = 0x4, offset = 0, fixed_abs, tag = 'sflag constant byte address 0x0 - dummy sync flag']
  #allocation23 [shape = 's32[]', space=sflag, size = 0x4, offset = 0, fixed_abs, tag = 'sflag constant byte address 0x0 - dummy sync flag']
  #allocation24 [shape = 's32[]', space=sflag, size = 0x4, offset = 0, fixed_abs, tag = 'sflag constant byte address 0x0 - dummy sync flag']
  #allocation25 [shape = 's32[]', space=sflag, size = 0x4, offset = 0, fixed_abs, tag = 'sflag constant byte address 0x0 - dummy sync flag']
  #allocation26 [shape = 's32[]', space=sflag, size = 0x4, offset = 0, fixed_abs, tag = 'sflag constant byte address 0x0 - dummy sync flag']
  #allocation27 [shape = 's32[]', space=sflag, size = 0x4, offset = 0, fixed_abs, tag = 'sflag constant byte address 0x0 - dummy sync flag']
  #allocation28 [shape = 's32[]', space=sflag, size = 0x4, offset = 0, fixed_abs, tag = 'sflag constant byte address 0x0 - dummy sync flag']
  #allocation29 [shape = 's32[]', space=sflag, size = 0x4, offset = 0, fixed_abs, tag = 'sflag constant byte address 0x0 - dummy sync flag']
  #allocation30 [shape = 's32[]', space=sflag, size = 0x4, offset = 0, fixed_abs, tag = 'sflag constant byte address 0x0 - dummy sync flag']
  #allocation31 [shape = 's32[]', space=sflag, size = 0x4, offset = 0, fixed_abs, tag = 'sflag constant byte address 0x0 - dummy sync flag']
  %s0 = inlined_call_operand.vmem [shape: s32[8], index: 0, kind: input, shape index: {}]
  %s1 = inlined_call_operand.vmem [shape: f32[2,8,128], index: 1, kind: input, shape index: {}, may-alias: {1,10}]
  %s2 = inlined_call_operand.hbm [shape: f32[20,128], index: 2, kind: input, shape index: {}]
  %s3 = inlined_call_operand.hbm [shape: f32[2,128,384], index: 3, kind: input, shape index: {}]
  %s4 = inlined_call_operand.hbm [shape: f32[2,128,384], index: 4, kind: input, shape index: {}]
  %s5 = inlined_call_operand.vmem [shape: f32[2,1,384], index: 5, kind: input, shape index: {}]
  %s6 = inlined_call_operand.vmem [shape: f32[2,1,384], index: 6, kind: input, shape index: {}]
  %s7 = inlined_call_operand.hbm [shape: f32[128,128], index: 7, kind: input, shape index: {}]
  %s8 = inlined_call_operand.vmem [shape: f32[1,128], index: 8, kind: input, shape index: {}]
  %s9 = inlined_call_operand.vmem [shape: f32[1,8,128], index: 9, kind: output, shape index: {0}]
  %s10 = inlined_call_operand.vmem [shape: f32[2,8,128], index: 10, kind: output, shape index: {1}, may-alias: {1,10}]
  %11 = xla_tuple %s9, %s10
  %s12 = sld [smem:[#allocation0]]
  $region106: #{decoder_forward.1} parent=0
    _
  %s14 = ssub.s32 1, %s12
  %s15 = scalar_select 0, %s14, %s12
  $region1: #{decoder_forward.1} parent=0
    #allocation7 [shape = 'u8[512]{0}', space=smem, size = 0x200, scoped, tag = 'input window, operand 0, single buffered']
    #allocation8 [shape = 's32[1]{0}', space=sflag, size = 0x4, scoped, tag = 'scoped memory for decoder_forward.1']
    #allocation9 [shape = 's32[1]{0}', space=sflag, size = 0x4, scoped, tag = 'scoped memory for decoder_forward.1']
    #allocation10 [shape = 'u8[393216]{0}', space=vmem, size = 0x60000, scoped, tag = 'input window, operand 3, single buffered']
    #allocation11 [shape = 'u8[393216]{0}', space=vmem, size = 0x60000, scoped, tag = 'input window, operand 4, single buffered']
    #allocation12 [shape = 's32[1]{0}', space=sflag, size = 0x4, scoped, tag = 'scoped memory for decoder_forward.1']
    #allocation13 [shape = 'u8[65536]{0}', space=vmem, size = 0x10000, scoped, tag = 'input window, operand 7, single buffered']
    %16 = vsyncpa [#allocation9], 0
    %17 = vsyncpa [#allocation8], 0
    %18 = vsyncpa [#allocation12], 0
    // Predicated region
    $region2: #{decoder_forward.1} parent=1 // pred_check
      _
    $region3: #{decoder_forward.1} parent=1 // pred_check_branch
      %20 = sbr.rel (0) target = $region5
    $region4: #{decoder_forward.1} parent=1 // pred_region
      %22 = vsyncadd [#allocation9], 0
      %s24 = sshll.u32 %s0, 4
      %s25 = int_to_ptr.vmem [resolvable:$true] %s24
      %27 = dma.vmem_to_smem %s25, 16, [#allocation7], [#allocation9]
    $region5: #{decoder_forward.1} parent=1 // pred_fallthru
      _
    // Predicated region
    $region6: #{decoder_forward.1} parent=1 // pred_check
      _
    $region7: #{decoder_forward.1} parent=1 // pred_check_branch
      %29 = sbr.rel (0) target = $region9
    $region8: #{decoder_forward.1} parent=1 // pred_region
      _
    $region9: #{decoder_forward.1} parent=1 // pred_fallthru
      _
    // Predicated region
    $region10: #{decoder_forward.1} parent=1 // pred_check
      _
    $region11: #{decoder_forward.1} parent=1 // pred_check_branch
      %31 = sbr.rel (0) target = $region13
    $region12: #{decoder_forward.1} parent=1 // pred_region
      %33 = vsyncadd [#allocation8], 0
      %s34 = sshll.u32 %s3, 4
      %s35 = int_to_ptr.hbm [resolvable:$true] %s34
      %s36 = sshll.u32 [#allocation10], 4
      %s37 = int_to_ptr.vmem [resolvable:$true] %s36
      %42 = dma.hbm_to_vmem [thread:$0]  %s35, 12288, %s37, [#allocation8], 384, 384, 24
    $region13: #{decoder_forward.1} parent=1 // pred_fallthru
      _
    // Predicated region
    $region14: #{decoder_forward.1} parent=1 // pred_check
      _
    $region15: #{decoder_forward.1} parent=1 // pred_check_branch
      %44 = sbr.rel (0) target = $region17
    $region16: #{decoder_forward.1} parent=1 // pred_region
      %46 = vsyncadd [#allocation12], 0
      %s47 = sshll.u32 %s4, 4
      %s48 = int_to_ptr.hbm [resolvable:$true] %s47
      %s49 = sshll.u32 [#allocation11], 4
      %s50 = int_to_ptr.vmem [resolvable:$true] %s49
      %55 = dma.hbm_to_vmem [thread:$0]  %s48, 12288, %s50, [#allocation12], 384, 384, 24
    $region17: #{decoder_forward.1} parent=1 // pred_fallthru
      _
    // Predicated region
    $region18: #{decoder_forward.1} parent=1 // pred_check
      _
    $region19: #{decoder_forward.1} parent=1 // pred_check_branch
      %57 = sbr.rel (0) target = $region21
    $region20: #{decoder_forward.1} parent=1 // pred_region
      _
    $region21: #{decoder_forward.1} parent=1 // pred_fallthru
      _
    // Predicated region
    $region22: #{decoder_forward.1} parent=1 // pred_check
      _
    $region23: #{decoder_forward.1} parent=1 // pred_check_branch
      %59 = sbr.rel (0) target = $region25
    $region24: #{decoder_forward.1} parent=1 // pred_region
      _
    $region25: #{decoder_forward.1} parent=1 // pred_fallthru
      _
    // Predicated region
    $region26: #{decoder_forward.1} parent=1 // pred_check
      _
    $region27: #{decoder_forward.1} parent=1 // pred_check_branch
      %61 = sbr.rel (0) target = $region29
    $region28: #{decoder_forward.1} parent=1 // pred_region
      %63 = vsyncadd [#allocation12], 0
      %s64 = sshll.u32 %s7, 4
      %s65 = int_to_ptr.hbm [resolvable:$true] %s64
      %s66 = sshll.u32 [#allocation13], 4
      %s67 = int_to_ptr.vmem [resolvable:$true] %s66
      %72 = dma.hbm_to_vmem [thread:$0]  %s65, 2048, %s67, [#allocation12], 128, 128, 8
    $region29: #{decoder_forward.1} parent=1 // pred_fallthru
      _
    // Predicated region
    $region30: #{decoder_forward.1} parent=1 // pred_check
      _
    $region31: #{decoder_forward.1} parent=1 // pred_check_branch
      %74 = sbr.rel (0) target = $region33
    $region32: #{decoder_forward.1} parent=1 // pred_region
      _
    $region33: #{decoder_forward.1} parent=1 // pred_fallthru
      _
    // Predicated region
    $region34: #{decoder_forward.1} parent=1 // pred_check
      _
    $region35: #{decoder_forward.1} parent=1 // pred_check_branch
      %76 = sbr.rel (0) target = $region37
    $region36: #{decoder_forward.1} parent=1 // pred_region
      %78 = dma.done [#allocation9], 16
    $region37: #{decoder_forward.1} parent=1 // pred_fallthru
      _
    // Predicated region
    $region38: #{decoder_forward.1} parent=1 // pred_check
      _
    $region39: #{decoder_forward.1} parent=1 // pred_check_branch
      %80 = sbr.rel (0) target = $region41
    $region40: #{decoder_forward.1} parent=1 // pred_region
      %82 = dma.done [#allocation8], 12288
    $region41: #{decoder_forward.1} parent=1 // pred_fallthru
      _
    // Predicated region
    $region42: #{decoder_forward.1} parent=1 // pred_check
      _
    $region43: #{decoder_forward.1} parent=1 // pred_check_branch
      %84 = sbr.rel (0) target = $region45
    $region44: #{decoder_forward.1} parent=1 // pred_region
      %86 = dma.done [#allocation12], 12288
    $region45: #{decoder_forward.1} parent=1 // pred_fallthru
      _
    // Predicated region
    $region46: #{decoder_forward.1} parent=1 // pred_check
      _
    $region47: #{decoder_forward.1} parent=1 // pred_check_branch
      %88 = sbr.rel (0) target = $region49
    $region48: #{decoder_forward.1} parent=1 // pred_region
      %90 = dma.done [#allocation12], 2048
    $region49: #{decoder_forward.1} parent=1 // pred_fallthru
      _
    %91 = sfence
    %p92 = scmp.eq.s32.totalorder 0, 0
    // Predicated region
    $region50: #{decoder_forward.1} parent=1 // pred_check
      %p93 = pneg %p92
    $region51: #{decoder_forward.1} parent=1 // pred_check_branch
      %95 = sbr.rel (%p93) target = $region53
    $region52: #{decoder_forward.1} parent=1 // pred_region
      %s96 = sld [smem:[#allocation7]]
      %s97 = scalar_lea.hbm %s2, %s96
      // Predicated region
      $region54: #{decoder_forward.1} parent=52 // pred_check
        _
      $region55: #{decoder_forward.1} parent=52 // pred_check_branch
        %99 = sbr.rel target = $region57
      $region56: #{decoder_forward.1} parent=52 // pred_region
        %100 = sst [smem:[#allocation16]] [#allocation15]
        %101 = sst [smem:[#allocation17]] [#allocation14]
      $region57: #{decoder_forward.1} parent=52 // pred_fallthru
        _
      %103 = shalt.err (0)
      %s105 = sshll.u32 %s97, 4
      %s106 = int_to_ptr.hbm [resolvable:$true] %s105
      %s107 = sshll.u32 [#allocation2], 4
      %s108 = int_to_ptr.vmem [resolvable:$true] %s107
      %110 = dma.hbm_to_vmem [thread:$0]  %s106, 16, %s108, [#allocation6]
      %s111 = sld [smem:[#allocation7 + $0x1]]
      %s112 = scalar_lea.hbm %s2, %s111
      %s113 = scalar_lea.vmem [#allocation2], 1
      // Predicated region
      $region58: #{decoder_forward.1} parent=52 // pred_check
        _
      $region59: #{decoder_forward.1} parent=52 // pred_check_branch
        %115 = sbr.rel target = $region61
      $region60: #{decoder_forward.1} parent=52 // pred_region
        %116 = sst [smem:[#allocation16]] [#allocation19]
        %117 = sst [smem:[#allocation17]] [#allocation18]
      $region61: #{decoder_forward.1} parent=52 // pred_fallthru
        _
      %119 = shalt.err (0)
      %s121 = sshll.u32 %s112, 4
      %s122 = int_to_ptr.hbm [resolvable:$true] %s121
      %s123 = sshll.u32 %s113, 4
      %s124 = int_to_ptr.vmem [resolvable:$true] %s123
      %126 = dma.hbm_to_vmem [thread:$0]  %s122, 16, %s124, [#allocation6]
      %s127 = sld [smem:[#allocation7 + $0x2]]
      %s128 = scalar_lea.hbm %s2, %s127
      %s129 = scalar_lea.vmem [#allocation2], 2
      // Predicated region
      $region62: #{decoder_forward.1} parent=52 // pred_check
        _
      $region63: #{decoder_forward.1} parent=52 // pred_check_branch
        %131 = sbr.rel target = $region65
      $region64: #{decoder_forward.1} parent=52 // pred_region
        %132 = sst [smem:[#allocation16]] [#allocation21]
        %133 = sst [smem:[#allocation17]] [#allocation20]
      $region65: #{decoder_forward.1} parent=52 // pred_fallthru
        _
      %135 = shalt.err (0)
      %s137 = sshll.u32 %s128, 4
      %s138 = int_to_ptr.hbm [resolvable:$true] %s137
      %s139 = sshll.u32 %s129, 4
      %s140 = int_to_ptr.vmem [resolvable:$true] %s139
      %142 = dma.hbm_to_vmem [thread:$0]  %s138, 16, %s140, [#allocation6]
      %s143 = sld [smem:[#allocation7 + $0x3]]
      %s144 = scalar_lea.hbm %s2, %s143
      %s145 = scalar_lea.vmem [#allocation2], 3
      // Predicated region
      $region66: #{decoder_forward.1} parent=52 // pred_check
        _
      $region67: #{decoder_forward.1} parent=52 // pred_check_branch
        %147 = sbr.rel target = $region69
      $region68: #{decoder_forward.1} parent=52 // pred_region
        %148 = sst [smem:[#allocation16]] [#allocation23]
        %149 = sst [smem:[#allocation17]] [#allocation22]
      $region69: #{decoder_forward.1} parent=52 // pred_fallthru
        _
      %151 = shalt.err (0)
      %s153 = sshll.u32 %s144, 4
      %s154 = int_to_ptr.hbm [resolvable:$true] %s153
      %s155 = sshll.u32 %s145, 4
      %s156 = int_to_ptr.vmem [resolvable:$true] %s155
      %158 = dma.hbm_to_vmem [thread:$0]  %s154, 16, %s156, [#allocation6]
      %s159 = sld [smem:[#allocation7 + $0x4]]
      %s160 = scalar_lea.hbm %s2, %s159
      %s161 = scalar_lea.vmem [#allocation2], 4
      // Predicated region
      $region70: #{decoder_forward.1} parent=52 // pred_check
        _
      $region71: #{decoder_forward.1} parent=52 // pred_check_branch
        %163 = sbr.rel target = $region73
      $region72: #{decoder_forward.1} parent=52 // pred_region
        %164 = sst [smem:[#allocation16]] [#allocation25]
        %165 = sst [smem:[#allocation17]] [#allocation24]
      $region73: #{decoder_forward.1} parent=52 // pred_fallthru
        _
      %167 = shalt.err (0)
      %s169 = sshll.u32 %s160, 4
      %s170 = int_to_ptr.hbm [resolvable:$true] %s169
      %s171 = sshll.u32 %s161, 4
      %s172 = int_to_ptr.vmem [resolvable:$true] %s171
      %174 = dma.hbm_to_vmem [thread:$0]  %s170, 16, %s172, [#allocation6]
      %s175 = sld [smem:[#allocation7 + $0x5]]
      %s176 = scalar_lea.hbm %s2, %s175
      %s177 = scalar_lea.vmem [#allocation2], 5
      // Predicated region
      $region74: #{decoder_forward.1} parent=52 // pred_check
        _
      $region75: #{decoder_forward.1} parent=52 // pred_check_branch
        %179 = sbr.rel target = $region77
      $region76: #{decoder_forward.1} parent=52 // pred_region
        %180 = sst [smem:[#allocation16]] [#allocation27]
        %181 = sst [smem:[#allocation17]] [#allocation26]
      $region77: #{decoder_forward.1} parent=52 // pred_fallthru
        _
      %183 = shalt.err (0)
      %s185 = sshll.u32 %s176, 4
      %s186 = int_to_ptr.hbm [resolvable:$true] %s185
      %s187 = sshll.u32 %s177, 4
      %s188 = int_to_ptr.vmem [resolvable:$true] %s187
      %190 = dma.hbm_to_vmem [thread:$0]  %s186, 16, %s188, [#allocation6]
      %s191 = sld [smem:[#allocation7 + $0x6]]
      %s192 = scalar_lea.hbm %s2, %s191
      %s193 = scalar_lea.vmem [#allocation2], 6
      // Predicated region
      $region78: #{decoder_forward.1} parent=52 // pred_check
        _
      $region79: #{decoder_forward.1} parent=52 // pred_check_branch
        %195 = sbr.rel target = $region81
      $region80: #{decoder_forward.1} parent=52 // pred_region
        %196 = sst [smem:[#allocation16]] [#allocation29]
        %197 = sst [smem:[#allocation17]] [#allocation28]
      $region81: #{decoder_forward.1} parent=52 // pred_fallthru
        _
      %199 = shalt.err (0)
      %s201 = sshll.u32 %s192, 4
      %s202 = int_to_ptr.hbm [resolvable:$true] %s201
      %s203 = sshll.u32 %s193, 4
      %s204 = int_to_ptr.vmem [resolvable:$true] %s203
      %206 = dma.hbm_to_vmem [thread:$0]  %s202, 16, %s204, [#allocation6]
      %s207 = sld [smem:[#allocation7 + $0x7]]
      %s208 = scalar_lea.hbm %s2, %s207
      %s209 = scalar_lea.vmem [#allocation2], 7
      // Predicated region
      $region82: #{decoder_forward.1} parent=52 // pred_check
        _
      $region83: #{decoder_forward.1} parent=52 // pred_check_branch
        %211 = sbr.rel target = $region85
      $region84: #{decoder_forward.1} parent=52 // pred_region
        %212 = sst [smem:[#allocation16]] [#allocation31]
        %213 = sst [smem:[#allocation17]] [#allocation30]
      $region85: #{decoder_forward.1} parent=52 // pred_fallthru
        _
      %215 = shalt.err (0)
      %s217 = sshll.u32 %s208, 4
      %s218 = int_to_ptr.hbm [resolvable:$true] %s217
      %s219 = sshll.u32 %s209, 4
      %s220 = int_to_ptr.vmem [resolvable:$true] %s219
      %222 = dma.hbm_to_vmem [thread:$0]  %s218, 16, %s220, [#allocation6]
      %v223 = vld [vmem:[%s1] sm:$0xff]
      %v224 = vld [vmem:[#allocation11] sm:$0xff]
      %v225 = vld [vmem:[#allocation11 + $0x8] sm:$0xff]
      %v226 = vld [vmem:[#allocation11 + $0x10] sm:$0xff]
      %v227 = vld [vmem:[#allocation11 + $0x18] sm:$0xff]
      %v228 = vld [vmem:[#allocation11 + $0x20] sm:$0xff]
      %v229 = vld [vmem:[#allocation11 + $0x28] sm:$0xff]
      %v230 = vld [vmem:[#allocation11 + $0x30] sm:$0xff]
      %v231 = vld [vmem:[#allocation11 + $0x38] sm:$0xff]
      %v232 = vld [vmem:[#allocation11 + $0x40] sm:$0xff]
      %v233 = vld [vmem:[#allocation11 + $0x48] sm:$0xff]
      %v234 = vld [vmem:[#allocation11 + $0x50] sm:$0xff]
      %v235 = vld [vmem:[#allocation11 + $0x58] sm:$0xff]
      %v236 = vld [vmem:[#allocation11 + $0x60] sm:$0xff]
      %v237 = vld [vmem:[#allocation11 + $0x68] sm:$0xff]
      %v238 = vld [vmem:[#allocation11 + $0x70] sm:$0xff]
      %v239 = vld [vmem:[#allocation11 + $0x78] sm:$0xff]
      %v240 = vld [vmem:[#allocation11 + $0x80] sm:$0xff]
      %v241 = vld [vmem:[#allocation11 + $0x88] sm:$0xff]
      %v242 = vld [vmem:[#allocation11 + $0x90] sm:$0xff]
      %v243 = vld [vmem:[#allocation11 + $0x98] sm:$0xff]
      %v244 = vld [vmem:[#allocation11 + $0xa0] sm:$0xff]
      %v245 = vld [vmem:[#allocation11 + $0xa8] sm:$0xff]
      %v246 = vld [vmem:[#allocation11 + $0xb0] sm:$0xff]
      %v247 = vld [vmem:[#allocation11 + $0xb8] sm:$0xff]
      %v248 = vld [vmem:[#allocation11 + $0xc0] sm:$0xff]
      %v249 = vld [vmem:[#allocation11 + $0xc8] sm:$0xff]
      %v250 = vld [vmem:[#allocation11 + $0xd0] sm:$0xff]
      %v251 = vld [vmem:[#allocation11 + $0xd8] sm:$0xff]
      %v252 = vld [vmem:[#allocation11 + $0xe0] sm:$0xff]
      %v253 = vld [vmem:[#allocation11 + $0xe8] sm:$0xff]
      %v254 = vld [vmem:[#allocation11 + $0xf0] sm:$0xff]
      %v255 = vld [vmem:[#allocation11 + $0xf8] sm:$0xff]
      %v256 = vld [vmem:[#allocation11 + $0x100] sm:$0xff]
      %v257 = vld [vmem:[#allocation11 + $0x108] sm:$0xff]
      %v258 = vld [vmem:[#allocation11 + $0x110] sm:$0xff]
      %v259 = vld [vmem:[#allocation11 + $0x118] sm:$0xff]
      %v260 = vld [vmem:[#allocation11 + $0x120] sm:$0xff]
      %v261 = vld [vmem:[#allocation11 + $0x128] sm:$0xff]
      %v262 = vld [vmem:[#allocation11 + $0x130] sm:$0xff]
      %v263 = vld [vmem:[#allocation11 + $0x138] sm:$0xff]
      %v264 = vld [vmem:[#allocation11 + $0x140] sm:$0xff]
      %v265 = vld [vmem:[#allocation11 + $0x148] sm:$0xff]
      %v266 = vld [vmem:[#allocation11 + $0x150] sm:$0xff]
      %v267 = vld [vmem:[#allocation11 + $0x158] sm:$0xff]
      %v268 = vld [vmem:[#allocation11 + $0x160] sm:$0xff]
      %v269 = vld [vmem:[#allocation11 + $0x168] sm:$0xff]
      %v270 = vld [vmem:[#allocation11 + $0x170] sm:$0xff]
      %v271 = vld [vmem:[#allocation11 + $0x178] sm:$0xff]
      %v272 = vld [vmem:[%s6] sm:$0x7]
      %v274 = vperm.slane %v272, 0
      %v275 = vperm.slane %v272, 1
      %v276 = vperm.slane %v272, 2
      %280 = vmatpush.msra.mxu0 %v269
      %281 = vmatpush.msra.mxu0 %v266
      %282 = vmatpush.msra.mxu0 %v263
      %283 = vmatpush.msra.mxu0 %v260
      %284 = vmatpush.msra.mxu0 %v257
      %285 = vmatpush.msra.mxu0 %v254
      %286 = vmatpush.msra.mxu0 %v251
      %287 = vmatpush.msra.mxu0 %v248
      %288 = vmatpush.msra.mxu0 %v245
      %289 = vmatpush.msra.mxu0 %v242
      %290 = vmatpush.msra.mxu0 %v239
      %291 = vmatpush.msra.mxu0 %v236
      %292 = vmatpush.msra.mxu0 %v233
      %293 = vmatpush.msra.mxu0 %v230
      %294 = vmatpush.msra.mxu0 %v227
      %295 = vmatpush.msra.mxu0 %v224
      %296 = vmatmul.f32.gmra.mxu0 %v223
      %v297 = vpop.f32.mrf.mxu0
      %v298 = vadd.f32 %v274, %v297
      %299 = vdwg.mxu0
      %300 = vmatpush.msra.mxu0 %v270
      %301 = vmatpush.msra.mxu0 %v267
      %302 = vmatpush.msra.mxu0 %v264
      %303 = vmatpush.msra.mxu0 %v261
      %304 = vmatpush.msra.mxu0 %v258
      %305 = vmatpush.msra.mxu0 %v255
      %306 = vmatpush.msra.mxu0 %v252
      %307 = vmatpush.msra.mxu0 %v249
      %308 = vmatpush.msra.mxu0 %v246
      %309 = vmatpush.msra.mxu0 %v243
      %310 = vmatpush.msra.mxu0 %v240
      %311 = vmatpush.msra.mxu0 %v237
      %312 = vmatpush.msra.mxu0 %v234
      %313 = vmatpush.msra.mxu0 %v231
      %314 = vmatpush.msra.mxu0 %v228
      %315 = vmatpush.msra.mxu0 %v225
      %316 = vmatmul.f32.gmra.mxu0 %v223
      %v317 = vpop.f32.mrf.mxu0
      %v318 = vadd.f32 %v275, %v317
      %319 = vdwg.mxu0
      %320 = vmatpush.msra.mxu0 %v271
      %321 = vmatpush.msra.mxu0 %v268
      %322 = vmatpush.msra.mxu0 %v265
      %323 = vmatpush.msra.mxu0 %v262
      %324 = vmatpush.msra.mxu0 %v259
      %325 = vmatpush.msra.mxu0 %v256
      %326 = vmatpush.msra.mxu0 %v253
      %327 = vmatpush.msra.mxu0 %v250
      %328 = vmatpush.msra.mxu0 %v247
      %329 = vmatpush.msra.mxu0 %v244
      %330 = vmatpush.msra.mxu0 %v241
      %331 = vmatpush.msra.mxu0 %v238
      %332 = vmatpush.msra.mxu0 %v235
      %333 = vmatpush.msra.mxu0 %v232
      %334 = vmatpush.msra.mxu0 %v229
      %335 = vmatpush.msra.mxu0 %v226
      %336 = vmatmul.f32.gmra.mxu0 %v223
      %v337 = vpop.f32.mrf.mxu0
      %v338 = vadd.f32 %v276, %v337
      %339 = vdwg.mxu0
      %s340 = sld [smem:[#allocation7]]
      %s341 = smul.u32 1, 1
      %s342 = sshll.u32 %s341, 4
      %343 = dma.done [#allocation6], %s342
      %s344 = sld [smem:[#allocation7 + $0x1]]
      %s345 = sshll.u32 %s341, 4
      %346 = dma.done [#allocation6], %s345
      %s347 = sld [smem:[#allocation7 + $0x2]]
      %s348 = sshll.u32 %s341, 4
      %349 = dma.done [#allocation6], %s348
      %s350 = sld [smem:[#allocation7 + $0x3]]
      %s351 = sshll.u32 %s341, 4
      %352 = dma.done [#allocation6], %s351
      %s353 = sld [smem:[#allocation7 + $0x4]]
      %s354 = sshll.u32 %s341, 4
      %355 = dma.done [#allocation6], %s354
      %s356 = sld [smem:[#allocation7 + $0x5]]
      %s357 = sshll.u32 %s341, 4
      %358 = dma.done [#allocation6], %s357
      %s359 = sld [smem:[#allocation7 + $0x6]]
      %s360 = sshll.u32 %s341, 4
      %361 = dma.done [#allocation6], %s360
      %s362 = sld [smem:[#allocation7 + $0x7]]
      %s363 = sshll.u32 %s341, 4
      %364 = dma.done [#allocation6], %s363
      %v365 = vld [vmem:[#allocation2] sm:$0xff]
      %v366 = vmax.f32 %v365, 0.0
      %v367 = vld [vmem:[%s1] sm:$0xff]
      %v368 = vld [vmem:[#allocation10] sm:$0xff]
      %v369 = vld [vmem:[#allocation10 + $0x8] sm:$0xff]
      %v370 = vld [vmem:[#allocation10 + $0x10] sm:$0xff]
      %v371 = vld [vmem:[#allocation10 + $0x18] sm:$0xff]
      %v372 = vld [vmem:[#allocation10 + $0x20] sm:$0xff]
      %v373 = vld [vmem:[#allocation10 + $0x28] sm:$0xff]
      %v374 = vld [vmem:[#allocation10 + $0x30] sm:$0xff]
      %v375 = vld [vmem:[#allocation10 + $0x38] sm:$0xff]
      %v376 = vld [vmem:[#allocation10 + $0x40] sm:$0xff]
      %v377 = vld [vmem:[#allocation10 + $0x48] sm:$0xff]
      %v378 = vld [vmem:[#allocation10 + $0x50] sm:$0xff]
      %v379 = vld [vmem:[#allocation10 + $0x58] sm:$0xff]
      %v380 = vld [vmem:[#allocation10 + $0x60] sm:$0xff]
      %v381 = vld [vmem:[#allocation10 + $0x68] sm:$0xff]
      %v382 = vld [vmem:[#allocation10 + $0x70] sm:$0xff]
      %v383 = vld [vmem:[#allocation10 + $0x78] sm:$0xff]
      %v384 = vld [vmem:[#allocation10 + $0x80] sm:$0xff]
      %v385 = vld [vmem:[#allocation10 + $0x88] sm:$0xff]
      %v386 = vld [vmem:[#allocation10 + $0x90] sm:$0xff]
      %v387 = vld [vmem:[#allocation10 + $0x98] sm:$0xff]
      %v388 = vld [vmem:[#allocation10 + $0xa0] sm:$0xff]
      %v389 = vld [vmem:[#allocation10 + $0xa8] sm:$0xff]
      %v390 = vld [vmem:[#allocation10 + $0xb0] sm:$0xff]
      %v391 = vld [vmem:[#allocation10 + $0xb8] sm:$0xff]
      %v392 = vld [vmem:[#allocation10 + $0xc0] sm:$0xff]
      %v393 = vld [vmem:[#allocation10 + $0xc8] sm:$0xff]
      %v394 = vld [vmem:[#allocation10 + $0xd0] sm:$0xff]
      %v395 = vld [vmem:[#allocation10 + $0xd8] sm:$0xff]
      %v396 = vld [vmem:[#allocation10 + $0xe0] sm:$0xff]
      %v397 = vld [vmem:[#allocation10 + $0xe8] sm:$0xff]
      %v398 = vld [vmem:[#allocation10 + $0xf0] sm:$0xff]
      %v399 = vld [vmem:[#allocation10 + $0xf8] sm:$0xff]
      %v400 = vld [vmem:[#allocation10 + $0x100] sm:$0xff]
      %v401 = vld [vmem:[#allocation10 + $0x108] sm:$0xff]
      %v402 = vld [vmem:[#allocation10 + $0x110] sm:$0xff]
      %v403 = vld [vmem:[#allocation10 + $0x118] sm:$0xff]
      %v404 = vld [vmem:[#allocation10 + $0x120] sm:$0xff]
      %v405 = vld [vmem:[#allocation10 + $0x128] sm:$0xff]
      %v406 = vld [vmem:[#allocation10 + $0x130] sm:$0xff]
      %v407 = vld [vmem:[#allocation10 + $0x138] sm:$0xff]
      %v408 = vld [vmem:[#allocation10 + $0x140] sm:$0xff]
      %v409 = vld [vmem:[#allocation10 + $0x148] sm:$0xff]
      %v410 = vld [vmem:[#allocation10 + $0x150] sm:$0xff]
      %v411 = vld [vmem:[#allocation10 + $0x158] sm:$0xff]
      %v412 = vld [vmem:[#allocation10 + $0x160] sm:$0xff]
      %v413 = vld [vmem:[#allocation10 + $0x168] sm:$0xff]
      %v414 = vld [vmem:[#allocation10 + $0x170] sm:$0xff]
      %v415 = vld [vmem:[#allocation10 + $0x178] sm:$0xff]
      %v416 = vld [vmem:[%s5] sm:$0x7]
      %v418 = vperm.slane %v416, 0
      %v419 = vperm.slane %v416, 1
      %v420 = vperm.slane %v416, 2
      %424 = vmatpush.msra.mxu0 %v413
      %425 = vmatpush.msra.mxu0 %v410
      %426 = vmatpush.msra.mxu0 %v407
      %427 = vmatpush.msra.mxu0 %v404
      %428 = vmatpush.msra.mxu0 %v401
      %429 = vmatpush.msra.mxu0 %v398
      %430 = vmatpush.msra.mxu0 %v395
      %431 = vmatpush.msra.mxu0 %v392
      %432 = vmatpush.msra.mxu0 %v389
      %433 = vmatpush.msra.mxu0 %v386
      %434 = vmatpush.msra.mxu0 %v383
      %435 = vmatpush.msra.mxu0 %v380
      %436 = vmatpush.msra.mxu0 %v377
      %437 = vmatpush.msra.mxu0 %v374
      %438 = vmatpush.msra.mxu0 %v371
      %439 = vmatpush.msra.mxu0 %v368
      %440 = vmatmul.f32.gmra.mxu0 %v366
      %v441 = vpop.f32.mrf.mxu0
      %v442 = vadd.f32 %v418, %v441
      %443 = vdwg.mxu0
      %444 = vmatpush.msra.mxu0 %v414
      %445 = vmatpush.msra.mxu0 %v411
      %446 = vmatpush.msra.mxu0 %v408
      %447 = vmatpush.msra.mxu0 %v405
      %448 = vmatpush.msra.mxu0 %v402
      %449 = vmatpush.msra.mxu0 %v399
      %450 = vmatpush.msra.mxu0 %v396
      %451 = vmatpush.msra.mxu0 %v393
      %452 = vmatpush.msra.mxu0 %v390
      %453 = vmatpush.msra.mxu0 %v387
      %454 = vmatpush.msra.mxu0 %v384
      %455 = vmatpush.msra.mxu0 %v381
      %456 = vmatpush.msra.mxu0 %v378
      %457 = vmatpush.msra.mxu0 %v375
      %458 = vmatpush.msra.mxu0 %v372
      %459 = vmatpush.msra.mxu0 %v369
      %460 = vmatmul.f32.gmra.mxu0 %v366
      %v461 = vpop.f32.mrf.mxu0
      %v462 = vadd.f32 %v419, %v461
      %463 = vdwg.mxu0
      %464 = vmatpush.msra.mxu0 %v415
      %465 = vmatpush.msra.mxu0 %v412
      %466 = vmatpush.msra.mxu0 %v409
      %467 = vmatpush.msra.mxu0 %v406
      %468 = vmatpush.msra.mxu0 %v403
      %469 = vmatpush.msra.mxu0 %v400
      %470 = vmatpush.msra.mxu0 %v397
      %471 = vmatpush.msra.mxu0 %v394
      %472 = vmatpush.msra.mxu0 %v391
      %473 = vmatpush.msra.mxu0 %v388
      %474 = vmatpush.msra.mxu0 %v385
      %475 = vmatpush.msra.mxu0 %v382
      %476 = vmatpush.msra.mxu0 %v379
      %477 = vmatpush.msra.mxu0 %v376
      %478 = vmatpush.msra.mxu0 %v373
      %479 = vmatpush.msra.mxu0 %v370
      %480 = vmatmul.f32.gmra.mxu0 %v366
      %v481 = vpop.f32.mrf.mxu0
      %v482 = vadd.f32 %v420, %v481
      %483 = vdwg.mxu0
      %v484 = vadd.f32 %v442, %v298
      %v485 = vxor.u32 %v484, 2147483648
      %v486 = vmul.f32 %v485, 1.442695
      %v487 = vpow.pop %v486
      %v488 = vadd.f32 %v487, 1.0
      %v489 = vrcp.pop %v488
      %v490 = vmul.f32 %v488, %v489
      %v491 = vsub.f32 1.0, %v490
      %v492 = vmul.f32 %v489, %v491
      %v493 = vadd.f32 %v489, %v492
      %vm494 = vweird.f32 %v488
      %vm495 = vweird.f32 %v489
      %vm496 = vmor %vm494, %vm495
      %v497 = vsel %vm496, %v489, %v493
      %v498 = vand.u32 2147483647, %v488
      %vm499 = vcmp.eq.f32.partialorder %v498, 8.507059e+37
      %v500 = vand.u32 %v488, 2147483648
      %v501 = vor.u32 1.1754944e-38, %v500
      %v502 = vsel %vm499, %v501, %v497
      %v503 = vmul.f32 1.0, %v502
      %v504 = vadd.f32 %v462, %v318
      %v505 = vxor.u32 %v504, 2147483648
      %v506 = vmul.f32 %v505, 1.442695
      %v507 = vpow.pop %v506
      %v508 = vadd.f32 %v507, 1.0
      %v509 = vrcp.pop %v508
      %v510 = vmul.f32 %v508, %v509
      %v511 = vsub.f32 1.0, %v510
      %v512 = vmul.f32 %v509, %v511
      %v513 = vadd.f32 %v509, %v512
      %vm514 = vweird.f32 %v508
      %vm515 = vweird.f32 %v509
      %vm516 = vmor %vm514, %vm515
      %v517 = vsel %vm516, %v509, %v513
      %v518 = vand.u32 2147483647, %v508
      %vm519 = vcmp.eq.f32.partialorder %v518, 8.507059e+37
      %v520 = vand.u32 %v508, 2147483648
      %v521 = vor.u32 1.1754944e-38, %v520
      %v522 = vsel %vm519, %v521, %v517
      %v523 = vmul.f32 1.0, %v522
      %v524 = vmul.f32 %v503, %v338
      %v525 = vadd.f32 %v482, %v524
      %v526 = vtanh.pop %v525
      %v527 = vsub.f32 1.0, %v523
      %v528 = vmul.f32 %v527, %v526
      %v529 = vmul.f32 %v523, %v367
      %v530 = vadd.f32 %v528, %v529
      %531 = vst [vmem:[%s10] sm:$0xff] %v530
      %s532 = scalar_lea.vmem %s1, 8
      %v533 = vld [vmem:[%s532] sm:$0xff]
      %s534 = scalar_lea.vmem [#allocation10], 384
      %v535 = vld [vmem:[%s534] sm:$0xff]
      %v536 = vld [vmem:[%s534 + $0x8] sm:$0xff]
      %v537 = vld [vmem:[%s534 + $0x10] sm:$0xff]
      %v538 = vld [vmem:[%s534 + $0x18] sm:$0xff]
      %v539 = vld [vmem:[%s534 + $0x20] sm:$0xff]
      %v540 = vld [vmem:[%s534 + $0x28] sm:$0xff]
      %v541 = vld [vmem:[%s534 + $0x30] sm:$0xff]
      %v542 = vld [vmem:[%s534 + $0x38] sm:$0xff]
      %v543 = vld [vmem:[%s534 + $0x40] sm:$0xff]
      %v544 = vld [vmem:[%s534 + $0x48] sm:$0xff]
      %v545 = vld [vmem:[%s534 + $0x50] sm:$0xff]
      %v546 = vld [vmem:[%s534 + $0x58] sm:$0xff]
      %v547 = vld [vmem:[%s534 + $0x60] sm:$0xff]
      %v548 = vld [vmem:[%s534 + $0x68] sm:$0xff]
      %v549 = vld [vmem:[%s534 + $0x70] sm:$0xff]
      %v550 = vld [vmem:[%s534 + $0x78] sm:$0xff]
      %v551 = vld [vmem:[%s534 + $0x80] sm:$0xff]
      %v552 = vld [vmem:[%s534 + $0x88] sm:$0xff]
      %v553 = vld [vmem:[%s534 + $0x90] sm:$0xff]
      %v554 = vld [vmem:[%s534 + $0x98] sm:$0xff]
      %v555 = vld [vmem:[%s534 + $0xa0] sm:$0xff]
      %v556 = vld [vmem:[%s534 + $0xa8] sm:$0xff]
      %v557 = vld [vmem:[%s534 + $0xb0] sm:$0xff]
      %v558 = vld [vmem:[%s534 + $0xb8] sm:$0xff]
      %v559 = vld [vmem:[%s534 + $0xc0] sm:$0xff]
      %v560 = vld [vmem:[%s534 + $0xc8] sm:$0xff]
      %v561 = vld [vmem:[%s534 + $0xd0] sm:$0xff]
      %v562 = vld [vmem:[%s534 + $0xd8] sm:$0xff]
      %v563 = vld [vmem:[%s534 + $0xe0] sm:$0xff]
      %v564 = vld [vmem:[%s534 + $0xe8] sm:$0xff]
      %v565 = vld [vmem:[%s534 + $0xf0] sm:$0xff]
      %v566 = vld [vmem:[%s534 + $0xf8] sm:$0xff]
      %v567 = vld [vmem:[%s534 + $0x100] sm:$0xff]
      %v568 = vld [vmem:[%s534 + $0x108] sm:$0xff]
      %v569 = vld [vmem:[%s534 + $0x110] sm:$0xff]
      %v570 = vld [vmem:[%s534 + $0x118] sm:$0xff]
      %v571 = vld [vmem:[%s534 + $0x120] sm:$0xff]
      %v572 = vld [vmem:[%s534 + $0x128] sm:$0xff]
      %v573 = vld [vmem:[%s534 + $0x130] sm:$0xff]
      %v574 = vld [vmem:[%s534 + $0x138] sm:$0xff]
      %v575 = vld [vmem:[%s534 + $0x140] sm:$0xff]
      %v576 = vld [vmem:[%s534 + $0x148] sm:$0xff]
      %v577 = vld [vmem:[%s534 + $0x150] sm:$0xff]
      %v578 = vld [vmem:[%s534 + $0x158] sm:$0xff]
      %v579 = vld [vmem:[%s534 + $0x160] sm:$0xff]
      %v580 = vld [vmem:[%s534 + $0x168] sm:$0xff]
      %v581 = vld [vmem:[%s534 + $0x170] sm:$0xff]
      %v582 = vld [vmem:[%s534 + $0x178] sm:$0xff]
      %s583 = scalar_lea.vmem %s5, 3
      %v584 = vld [vmem:[%s583] sm:$0x7]
      %v586 = vperm.slane %v584, 0
      %v587 = vperm.slane %v584, 1
      %v588 = vperm.slane %v584, 2
      %592 = vmatpush.msra.mxu0 %v580
      %593 = vmatpush.msra.mxu0 %v577
      %594 = vmatpush.msra.mxu0 %v574
      %595 = vmatpush.msra.mxu0 %v571
      %596 = vmatpush.msra.mxu0 %v568
      %597 = vmatpush.msra.mxu0 %v565
      %598 = vmatpush.msra.mxu0 %v562
      %599 = vmatpush.msra.mxu0 %v559
      %600 = vmatpush.msra.mxu0 %v556
      %601 = vmatpush.msra.mxu0 %v553
      %602 = vmatpush.msra.mxu0 %v550
      %603 = vmatpush.msra.mxu0 %v547
      %604 = vmatpush.msra.mxu0 %v544
      %605 = vmatpush.msra.mxu0 %v541
      %606 = vmatpush.msra.mxu0 %v538
      %607 = vmatpush.msra.mxu0 %v535
      %608 = vmatmul.f32.gmra.mxu0 %v530
      %v609 = vpop.f32.mrf.mxu0
      %v610 = vadd.f32 %v586, %v609
      %611 = vdwg.mxu0
      %612 = vmatpush.msra.mxu0 %v581
      %613 = vmatpush.msra.mxu0 %v578
      %614 = vmatpush.msra.mxu0 %v575
      %615 = vmatpush.msra.mxu0 %v572
      %616 = vmatpush.msra.mxu0 %v569
      %617 = vmatpush.msra.mxu0 %v566
      %618 = vmatpush.msra.mxu0 %v563
      %619 = vmatpush.msra.mxu0 %v560
      %620 = vmatpush.msra.mxu0 %v557
      %621 = vmatpush.msra.mxu0 %v554
      %622 = vmatpush.msra.mxu0 %v551
      %623 = vmatpush.msra.mxu0 %v548
      %624 = vmatpush.msra.mxu0 %v545
      %625 = vmatpush.msra.mxu0 %v542
      %626 = vmatpush.msra.mxu0 %v539
      %627 = vmatpush.msra.mxu0 %v536
      %628 = vmatmul.f32.gmra.mxu0 %v530
      %v629 = vpop.f32.mrf.mxu0
      %v630 = vadd.f32 %v587, %v629
      %631 = vdwg.mxu0
      %632 = vmatpush.msra.mxu0 %v582
      %633 = vmatpush.msra.mxu0 %v579
      %634 = vmatpush.msra.mxu0 %v576
      %635 = vmatpush.msra.mxu0 %v573
      %636 = vmatpush.msra.mxu0 %v570
      %637 = vmatpush.msra.mxu0 %v567
      %638 = vmatpush.msra.mxu0 %v564
      %639 = vmatpush.msra.mxu0 %v561
      %640 = vmatpush.msra.mxu0 %v558
      %641 = vmatpush.msra.mxu0 %v555
      %642 = vmatpush.msra.mxu0 %v552
      %643 = vmatpush.msra.mxu0 %v549
      %644 = vmatpush.msra.mxu0 %v546
      %645 = vmatpush.msra.mxu0 %v543
      %646 = vmatpush.msra.mxu0 %v540
      %647 = vmatpush.msra.mxu0 %v537
      %648 = vmatmul.f32.gmra.mxu0 %v530
      %v649 = vpop.f32.mrf.mxu0
      %v650 = vadd.f32 %v588, %v649
      %651 = vdwg.mxu0
      %s652 = scalar_lea.vmem [#allocation11], 384
      %v653 = vld [vmem:[%s652] sm:$0xff]
      %v654 = vld [vmem:[%s652 + $0x8] sm:$0xff]
      %v655 = vld [vmem:[%s652 + $0x10] sm:$0xff]
      %v656 = vld [vmem:[%s652 + $0x18] sm:$0xff]
      %v657 = vld [vmem:[%s652 + $0x20] sm:$0xff]
      %v658 = vld [vmem:[%s652 + $0x28] sm:$0xff]
      %v659 = vld [vmem:[%s652 + $0x30] sm:$0xff]
      %v660 = vld [vmem:[%s652 + $0x38] sm:$0xff]
      %v661 = vld [vmem:[%s652 + $0x40] sm:$0xff]
      %v662 = vld [vmem:[%s652 + $0x48] sm:$0xff]
      %v663 = vld [vmem:[%s652 + $0x50] sm:$0xff]
      %v664 = vld [vmem:[%s652 + $0x58] sm:$0xff]
      %v665 = vld [vmem:[%s652 + $0x60] sm:$0xff]
      %v666 = vld [vmem:[%s652 + $0x68] sm:$0xff]
      %v667 = vld [vmem:[%s652 + $0x70] sm:$0xff]
      %v668 = vld [vmem:[%s652 + $0x78] sm:$0xff]
      %v669 = vld [vmem:[%s652 + $0x80] sm:$0xff]
      %v670 = vld [vmem:[%s652 + $0x88] sm:$0xff]
      %v671 = vld [vmem:[%s652 + $0x90] sm:$0xff]
      %v672 = vld [vmem:[%s652 + $0x98] sm:$0xff]
      %v673 = vld [vmem:[%s652 + $0xa0] sm:$0xff]
      %v674 = vld [vmem:[%s652 + $0xa8] sm:$0xff]
      %v675 = vld [vmem:[%s652 + $0xb0] sm:$0xff]
      %v676 = vld [vmem:[%s652 + $0xb8] sm:$0xff]
      %v677 = vld [vmem:[%s652 + $0xc0] sm:$0xff]
      %v678 = vld [vmem:[%s652 + $0xc8] sm:$0xff]
      %v679 = vld [vmem:[%s652 + $0xd0] sm:$0xff]
      %v680 = vld [vmem:[%s652 + $0xd8] sm:$0xff]
      %v681 = vld [vmem:[%s652 + $0xe0] sm:$0xff]
      %v682 = vld [vmem:[%s652 + $0xe8] sm:$0xff]
      %v683 = vld [vmem:[%s652 + $0xf0] sm:$0xff]
      %v684 = vld [vmem:[%s652 + $0xf8] sm:$0xff]
      %v685 = vld [vmem:[%s652 + $0x100] sm:$0xff]
      %v686 = vld [vmem:[%s652 + $0x108] sm:$0xff]
      %v687 = vld [vmem:[%s652 + $0x110] sm:$0xff]
      %v688 = vld [vmem:[%s652 + $0x118] sm:$0xff]
      %v689 = vld [vmem:[%s652 + $0x120] sm:$0xff]
      %v690 = vld [vmem:[%s652 + $0x128] sm:$0xff]
      %v691 = vld [vmem:[%s652 + $0x130] sm:$0xff]
      %v692 = vld [vmem:[%s652 + $0x138] sm:$0xff]
      %v693 = vld [vmem:[%s652 + $0x140] sm:$0xff]
      %v694 = vld [vmem:[%s652 + $0x148] sm:$0xff]
      %v695 = vld [vmem:[%s652 + $0x150] sm:$0xff]
      %v696 = vld [vmem:[%s652 + $0x158] sm:$0xff]
      %v697 = vld [vmem:[%s652 + $0x160] sm:$0xff]
      %v698 = vld [vmem:[%s652 + $0x168] sm:$0xff]
      %v699 = vld [vmem:[%s652 + $0x170] sm:$0xff]
      %v700 = vld [vmem:[%s652 + $0x178] sm:$0xff]
      %s701 = scalar_lea.vmem %s6, 3
      %v702 = vld [vmem:[%s701] sm:$0x7]
      %v704 = vperm.slane %v702, 0
      %v705 = vperm.slane %v702, 1
      %v706 = vperm.slane %v702, 2
      %710 = vmatpush.msra.mxu0 %v698
      %711 = vmatpush.msra.mxu0 %v695
      %712 = vmatpush.msra.mxu0 %v692
      %713 = vmatpush.msra.mxu0 %v689
      %714 = vmatpush.msra.mxu0 %v686
      %715 = vmatpush.msra.mxu0 %v683
      %716 = vmatpush.msra.mxu0 %v680
      %717 = vmatpush.msra.mxu0 %v677
      %718 = vmatpush.msra.mxu0 %v674
      %719 = vmatpush.msra.mxu0 %v671
      %720 = vmatpush.msra.mxu0 %v668
      %721 = vmatpush.msra.mxu0 %v665
      %722 = vmatpush.msra.mxu0 %v662
      %723 = vmatpush.msra.mxu0 %v659
      %724 = vmatpush.msra.mxu0 %v656
      %725 = vmatpush.msra.mxu0 %v653
      %726 = vmatmul.f32.gmra.mxu0 %v533
      %v727 = vpop.f32.mrf.mxu0
      %v728 = vadd.f32 %v704, %v727
      %729 = vdwg.mxu0
      %730 = vmatpush.msra.mxu0 %v699
      %731 = vmatpush.msra.mxu0 %v696
      %732 = vmatpush.msra.mxu0 %v693
      %733 = vmatpush.msra.mxu0 %v690
      %734 = vmatpush.msra.mxu0 %v687
      %735 = vmatpush.msra.mxu0 %v684
      %736 = vmatpush.msra.mxu0 %v681
      %737 = vmatpush.msra.mxu0 %v678
      %738 = vmatpush.msra.mxu0 %v675
      %739 = vmatpush.msra.mxu0 %v672
      %740 = vmatpush.msra.mxu0 %v669
      %741 = vmatpush.msra.mxu0 %v666
      %742 = vmatpush.msra.mxu0 %v663
      %743 = vmatpush.msra.mxu0 %v660
      %744 = vmatpush.msra.mxu0 %v657
      %745 = vmatpush.msra.mxu0 %v654
      %746 = vmatmul.f32.gmra.mxu0 %v533
      %v747 = vpop.f32.mrf.mxu0
      %v748 = vadd.f32 %v705, %v747
      %749 = vdwg.mxu0
      %750 = vmatpush.msra.mxu0 %v700
      %751 = vmatpush.msra.mxu0 %v697
      %752 = vmatpush.msra.mxu0 %v694
      %753 = vmatpush.msra.mxu0 %v691
      %754 = vmatpush.msra.mxu0 %v688
      %755 = vmatpush.msra.mxu0 %v685
      %756 = vmatpush.msra.mxu0 %v682
      %757 = vmatpush.msra.mxu0 %v679
      %758 = vmatpush.msra.mxu0 %v676
      %759 = vmatpush.msra.mxu0 %v673
      %760 = vmatpush.msra.mxu0 %v670
      %761 = vmatpush.msra.mxu0 %v667
      %762 = vmatpush.msra.mxu0 %v664
      %763 = vmatpush.msra.mxu0 %v661
      %764 = vmatpush.msra.mxu0 %v658
      %765 = vmatpush.msra.mxu0 %v655
      %766 = vmatmul.f32.gmra.mxu0 %v533
      %v767 = vpop.f32.mrf.mxu0
      %v768 = vadd.f32 %v706, %v767
      %769 = vdwg.mxu0
      %v770 = vadd.f32 %v610, %v728
      %v771 = vxor.u32 %v770, 2147483648
      %v772 = vmul.f32 %v771, 1.442695
      %v773 = vpow.pop %v772
      %v774 = vadd.f32 %v773, 1.0
      %v775 = vrcp.pop %v774
      %v776 = vmul.f32 %v774, %v775
      %v777 = vsub.f32 1.0, %v776
      %v778 = vmul.f32 %v775, %v777
      %v779 = vadd.f32 %v775, %v778
      %vm780 = vweird.f32 %v774
      %vm781 = vweird.f32 %v775
      %vm782 = vmor %vm780, %vm781
      %v783 = vsel %vm782, %v775, %v779
      %v784 = vand.u32 2147483647, %v774
      %vm785 = vcmp.eq.f32.partialorder %v784, 8.507059e+37
      %v786 = vand.u32 %v774, 2147483648
      %v787 = vor.u32 1.1754944e-38, %v786
      %v788 = vsel %vm785, %v787, %v783
      %v789 = vmul.f32 1.0, %v788
      %v790 = vadd.f32 %v630, %v748
      %v791 = vxor.u32 %v790, 2147483648
      %v792 = vmul.f32 %v791, 1.442695
      %v793 = vpow.pop %v792
      %v794 = vadd.f32 %v793, 1.0
      %v795 = vrcp.pop %v794
      %v796 = vmul.f32 %v794, %v795
      %v797 = vsub.f32 1.0, %v796
      %v798 = vmul.f32 %v795, %v797
      %v799 = vadd.f32 %v795, %v798
      %vm800 = vweird.f32 %v794
      %vm801 = vweird.f32 %v795
      %vm802 = vmor %vm800, %vm801
      %v803 = vsel %vm802, %v795, %v799
      %v804 = vand.u32 2147483647, %v794
      %vm805 = vcmp.eq.f32.partialorder %v804, 8.507059e+37
      %v806 = vand.u32 %v794, 2147483648
      %v807 = vor.u32 1.1754944e-38, %v806
      %v808 = vsel %vm805, %v807, %v803
      %v809 = vmul.f32 1.0, %v808
      %v810 = vmul.f32 %v789, %v768
      %v811 = vadd.f32 %v650, %v810
      %v812 = vtanh.pop %v811
      %v813 = vsub.f32 1.0, %v809
      %v814 = vmul.f32 %v813, %v812
      %v815 = vmul.f32 %v809, %v533
      %v816 = vadd.f32 %v814, %v815
      %s817 = scalar_lea.vmem %s10, 8
      %818 = vst [vmem:[%s817] sm:$0xff] %v816
      %819 = vst [vmem:[#allocation3] sm:$0xff] %v816
      %vm820 = vcmask 7168
      %821 = vst.msk [vmem:[#allocation4] sm:$0xff] %vm820, -1e+30
      %822 = vst.msk [vmem:[#allocation5] sm:$0xff] %vm820, 0.0
    $region53: #{decoder_forward.1} parent=1 // pred_fallthru
      _
    %v823 = vld [vmem:[#allocation3] sm:$0xff]
    %v824 = vld [vmem:[#allocation13] sm:$0xff]
    %v825 = vld [vmem:[#allocation13 + $0x8] sm:$0xff]
    %v826 = vld [vmem:[#allocation13 + $0x10] sm:$0xff]
    %v827 = vld [vmem:[#allocation13 + $0x18] sm:$0xff]
    %v828 = vld [vmem:[#allocation13 + $0x20] sm:$0xff]
    %v829 = vld [vmem:[#allocation13 + $0x28] sm:$0xff]
    %v830 = vld [vmem:[#allocation13 + $0x30] sm:$0xff]
    %v831 = vld [vmem:[#allocation13 + $0x38] sm:$0xff]
    %v832 = vld [vmem:[#allocation13 + $0x40] sm:$0xff]
    %v833 = vld [vmem:[#allocation13 + $0x48] sm:$0xff]
    %v834 = vld [vmem:[#allocation13 + $0x50] sm:$0xff]
    %v835 = vld [vmem:[#allocation13 + $0x58] sm:$0xff]
    %v836 = vld [vmem:[#allocation13 + $0x60] sm:$0xff]
    %v837 = vld [vmem:[#allocation13 + $0x68] sm:$0xff]
    %v838 = vld [vmem:[#allocation13 + $0x70] sm:$0xff]
    %v839 = vld [vmem:[#allocation13 + $0x78] sm:$0xff]
    %v840 = vld [vmem:[%s8] sm:$0x1]
    %v842 = vperm.slane %v840, 0
    %844 = vmatpush.msra.mxu0 %v839
    %845 = vmatpush.msra.mxu0 %v838
    %846 = vmatpush.msra.mxu0 %v837
    %847 = vmatpush.msra.mxu0 %v836
    %848 = vmatpush.msra.mxu0 %v835
    %849 = vmatpush.msra.mxu0 %v834
    %850 = vmatpush.msra.mxu0 %v833
    %851 = vmatpush.msra.mxu0 %v832
    %852 = vmatpush.msra.mxu0 %v831
    %853 = vmatpush.msra.mxu0 %v830
    %854 = vmatpush.msra.mxu0 %v829
    %855 = vmatpush.msra.mxu0 %v828
    %856 = vmatpush.msra.mxu0 %v827
    %857 = vmatpush.msra.mxu0 %v826
    %858 = vmatpush.msra.mxu0 %v825
    %859 = vmatpush.msra.mxu0 %v824
    %860 = vmatmul.f32.gmra.mxu0 %v823
    %v861 = vpop.f32.mrf.mxu0
    %v862 = vadd.f32 %v842, %v861
    %863 = vdwg.mxu0
    %v864 = vld [vmem:[#allocation4] sm:$0xff]
    %865 = vmax.xlane.f32.xlu0 %v862
    %v866 = vpop.xlane.xlu0 %865
    %v867 = vmax.f32 %v864, %v866
    %v868 = vld [vmem:[#allocation5] sm:$0xff]
    %v869 = vsub.f32 %v864, %v867
    %v870 = vmul.f32 %v869, 1.442695
    %v871 = vpow.pop %v870
    %v872 = vmul.f32 %v868, %v871
    %874 = vset.pattern.permute.xlu0 0
    %875 = vperm.xlu0 %874, %v867
    %v876 = vpop.permute.xlu0 %875
    %v878 = vsub.f32 %v862, %v876
    %v879 = vmul.f32 %v878, 1.442695
    %v880 = vpow.pop %v879
    %881 = vadd.xlane.f32.xlu0 %v880
    %v882 = vpop.xlane.xlu0 %881
    %v883 = vadd.f32 %v872, %v882
    %vm884 = vcmask 7168
    %885 = vst.msk [vmem:[#allocation5] sm:$0xff] %vm884, %v883
    %886 = vst.msk [vmem:[#allocation4] sm:$0xff] %vm884, %v867
    %s887 = smul.u32 0, 8
    %s888 = scalar_lea.vmem %s9, %s887
    %889 = vst [vmem:[%s888] sm:$0xff] %v862
    // Predicated region
    $region86: #{decoder_forward.1} parent=1 // pred_check
      %p890 = pneg %p92
    $region87: #{decoder_forward.1} parent=1 // pred_check_branch
      %892 = sbr.rel (%p890) target = $region89
    $region88: #{decoder_forward.1} parent=1 // pred_region
      %v893 = vld [vmem:[#allocation4] sm:$0xff]
      %v894 = vld [vmem:[#allocation5] sm:$0xff]
      %v895 = vlog2.pop %v894
      %v896 = vmul.f32 %v895, 0.6931472
      %v897 = vadd.f32 %v893, %v896
      %v898 = vld [vmem:[%s9] sm:$0xff]
      %900 = vset.pattern.permute.xlu0 0
      %901 = vperm.xlu0 %900, %v897
      %v902 = vpop.permute.xlu0 %901
      %v904 = vsub.f32 %v898, %v902
      %905 = vst [vmem:[%s9] sm:$0xff] %v904
    $region89: #{decoder_forward.1} parent=1 // pred_fallthru
      _
    // Predicated region
    $region90: #{decoder_forward.1} parent=1 // pred_check
      _
    $region91: #{decoder_forward.1} parent=1 // pred_check_branch
      %907 = sbr.rel (0) target = $region93
    $region92: #{decoder_forward.1} parent=1 // pred_region
      _
    $region93: #{decoder_forward.1} parent=1 // pred_fallthru
      _
    // Predicated region
    $region94: #{decoder_forward.1} parent=1 // pred_check
      _
    $region95: #{decoder_forward.1} parent=1 // pred_check_branch
      %909 = sbr.rel (0) target = $region97
    $region96: #{decoder_forward.1} parent=1 // pred_region
      _
    $region97: #{decoder_forward.1} parent=1 // pred_fallthru
      _
    // Predicated region
    $region98: #{decoder_forward.1} parent=1 // pred_check
      _
    $region99: #{decoder_forward.1} parent=1 // pred_check_branch
      %911 = sbr.rel (0) target = $region101
    $region100: #{decoder_forward.1} parent=1 // pred_region
      _
    $region101: #{decoder_forward.1} parent=1 // pred_fallthru
      _
    // Predicated region
    $region102: #{decoder_forward.1} parent=1 // pred_check
      _
    $region103: #{decoder_forward.1} parent=1 // pred_check_branch
      %913 = sbr.rel (0) target = $region105
    $region104: #{decoder_forward.1} parent=1 // pred_region
      _
    $region105: #{decoder_forward.1} parent=1 // pred_fallthru
      _
    %914 = vsyncpa [#allocation8], 1
    %915 = vsyncpa [#allocation12], 1
    %916 = vsyncpa [#allocation9], 1
  %917 = vsyncmov [#allocation6]
  %s918 = vpop.sfrf %917
  %p919 = scmp.eq.s32.totalorder %s918, 0
  %p920 = pneg %p919
  %922 = shalt.err (%p920)

</llo_original>
